<compile_context>
chip_gen: v7x
topology: tpu7x:2x2x1
jax: 0.10.0
libtpu: 0.0.40
codegen_flags: <defaults>
</compile_context>

<pallas_src>
import math

import jax
import jax.numpy as jnp
from jax.experimental import pallas as pl
from jax.experimental.pallas import tpu as pltpu

_EPS = 1e-5

_ARG_ORDER = (
    "c1w", "c1b", "c2w", "c2b",
    "fcw", "fcb", "ln1g", "ln1b",
    "wih", "bsum", "whh",
    "ln2g", "ln2b", "fc2w", "fc2b",
)


def _trading_repr_kernel(
    x_ref,                                    # (T, TB, F) f32, time-major batch tile
    c1w_ref, c1b_ref,                         # (3*F, C) bf16, (1, C) f32 (BN folded)
    c2w_ref, c2b_ref,                         # (3*C, C) bf16, (1, C) f32 (BN folded)
    fcw_ref, fcb_ref, ln1g_ref, ln1b_ref,     # post_cnn_fc + post_cnn_ln
    wih_ref, bsum_ref, whh_ref,               # LSTM: (H,4Hl) bf16, (1,4Hl) f32, (Hl,4Hl) f32
    ln2g_ref, ln2b_ref, fc2w_ref, fc2b_ref,   # lstm_ln + final_fc
    out_ref,                                  # (TB, H)
    im1_scr, im2_scr, gx_scr,                 # VMEM scratch
):
    T, TB, F = x_ref.shape
    R = T * TB                                # time-major flat rows: r = t*TB + b
    Hl = whh_ref.shape[0]

    def conv_bn_relu(x2d, im_ref, w_ref, b_ref):
        # Conv1d(kernel=3, padding=1) along T as a single im2col matmul.
        # Rows are time-major, so "previous timestep" of row r is row r - TB.
        Cin = x2d.shape[-1]
        # tap k=1 : x[t]
        im_ref[:, Cin:2 * Cin] = x2d
        # tap k=0 : x[t-1] (zero at t == 0)
        im_ref[0:TB, 0:Cin] = jnp.zeros((TB, Cin), jnp.float32)
        im_ref[TB:R, 0:Cin] = x2d[0:R - TB, :]
        # tap k=2 : x[t+1] (zero at t == T-1)
        im_ref[0:R - TB, 2 * Cin:3 * Cin] = x2d[TB:R, :]
        im_ref[R - TB:R, 2 * Cin:3 * Cin] = jnp.zeros((TB, Cin), jnp.float32)
        # bf16 matmul, f32 accumulation.  BatchNorm already folded into w/b.
        y = jnp.dot(im_ref[...].astype(jnp.bfloat16), w_ref[...],
                    preferred_element_type=jnp.float32) + b_ref[...]
        return jnp.maximum(y, 0.0)

    x2d = x_ref[...].astype(jnp.float32).reshape(R, F)
    feat = conv_bn_relu(x2d, im1_scr, c1w_ref, c1b_ref)    # (R, C)
    feat = conv_bn_relu(feat, im2_scr, c2w_ref, c2b_ref)   # (R, C)

    # post_cnn_fc + LayerNorm + ReLU (LayerNorm in f32)
    f2 = jnp.dot(feat.astype(jnp.bfloat16), fcw_ref[...],
                 preferred_element_type=jnp.float32) + fcb_ref[...]
    mu = jnp.mean(f2, axis=-1, keepdims=True)
    var = jnp.mean((f2 - mu) ** 2, axis=-1, keepdims=True)
    f2 = (f2 - mu) * jax.lax.rsqrt(var + _EPS) * ln1g_ref[...] + ln1b_ref[...]
    f2 = jnp.maximum(f2, 0.0)                               # (R, H)

    # Hoisted LSTM input projection: ONE (R, H) @ (H, 4*Hl) matmul with the
    # combined bias; stored time-major so the per-step read is gx_scr[t].
    gx = jnp.dot(f2.astype(jnp.bfloat16), wih_ref[...],
                 preferred_element_type=jnp.float32) + bsum_ref[...]
    gx_scr[...] = gx.reshape(T, TB, 4 * Hl)

    # LSTM recurrence (PyTorch gate order i, f, g, o).  h/c live in registers
    # as fori_loop carries; only h @ W_hh is done per step, in f32.  Applying
    # sigmoid/tanh to the full 4*Hl gate vector keeps the EUP dispatches at
    # vreg granularity (2 passes/step) before the lane slices.
    whh = whh_ref[...]

    def step(t, carry):
        h, c = carry
        g = gx_scr[t] + jnp.dot(h, whh, preferred_element_type=jnp.float32)
        sg = jax.nn.sigmoid(g)
        tg = jnp.tanh(g)
        i_g = sg[:, 0 * Hl:1 * Hl]
        f_g = sg[:, 1 * Hl:2 * Hl]
        g_g = tg[:, 2 * Hl:3 * Hl]
        o_g = sg[:, 3 * Hl:4 * Hl]
        c = f_g * c + i_g * g_g
        h = o_g * jnp.tanh(c)
        return h, c

    h0 = jnp.zeros((TB, Hl), jnp.float32)
    c0 = jnp.zeros((TB, Hl), jnp.float32)
    h, _ = jax.lax.fori_loop(0, T, step, (h0, c0), unroll=True)

    # lstm_ln on the final hidden state + ReLU(final_fc)
    mu = jnp.mean(h, axis=-1, keepdims=True)
    var = jnp.mean((h - mu) ** 2, axis=-1, keepdims=True)
    hn = (h - mu) * jax.lax.rsqrt(var + _EPS) * ln2g_ref[...] + ln2b_ref[...]
    out = jnp.dot(hn, fc2w_ref[...],
                  preferred_element_type=jnp.float32) + fc2b_ref[...]
    out_ref[...] = jnp.maximum(out, 0.0).astype(out_ref.dtype)


def _const_index_map(ndim):
    return lambda b: (0,) * ndim


def _pick_batch_tile(B, T, F, C, H, Hl, *, cap=128, budget_bytes=12 * 1024 * 1024):
    """Largest multiple-of-8 divisor of B (<= cap) whose per-step working set
    fits comfortably in VMEM; small / odd batches fall back to a single block
    of the full batch (the (8,128) rule allows block == full array dim)."""
    if B % 8 != 0:
        return B

    def step_bytes(tb):
        r = T * tb
        scratch = r * (3 * F + 3 * C) + T * tb * 4 * Hl          # f32 scratch words
        io = 2 * (T * tb * F) + 2 * (tb * H)                     # double-buffered blocks
        live = r * (3 * C + 2 * H + 4 * Hl)                      # rough live-value bound
        return 4 * (scratch + io + live)

    best = 8
    for tb in range(16, min(B, cap) + 1, 8):
        if B % tb == 0 and step_bytes(tb) <= budget_bytes:
            best = tb
    return best


def trading_repr_forward(x, params, *, batch_tile=None):
    """x: (B, T, num_features) float32 -> (B, hidden_size) float32."""
    B, T, F = x.shape
    C = params["c1w"].shape[-1]
    H = params["fcw"].shape[-1]
    Hl = params["whh"].shape[0]

    if batch_tile is None:
        batch_tile = _pick_batch_tile(B, T, F, C, H, Hl)
    assert B % batch_tile == 0 and (batch_tile % 8 == 0 or batch_tile == B)
    TB = batch_tile
    R = T * TB

    x_t = jnp.transpose(x, (1, 0, 2))   # (T, B, F): time-major (XLA-side plumbing)

    args = [x_t] + [params[k] for k in _ARG_ORDER]
    in_specs = [pl.BlockSpec((T, TB, F), lambda b: (0, b, 0))]
    for k in _ARG_ORDER:
        w = params[k]
        in_specs.append(pl.BlockSpec(w.shape, _const_index_map(w.ndim)))

    return pl.pallas_call(
        _trading_repr_kernel,
        out_shape=jax.ShapeDtypeStruct((B, H), jnp.float32),
        grid=(B // TB,),
        in_specs=in_specs,
        out_specs=pl.BlockSpec((TB, H), lambda b: (b, 0)),
        scratch_shapes=[
            pltpu.VMEM((R, 3 * F), jnp.float32),       # conv1 im2col buffer
            pltpu.VMEM((R, 3 * C), jnp.float32),       # conv2 im2col buffer
            pltpu.VMEM((T, TB, 4 * Hl), jnp.float32),  # hoisted LSTM gate inputs
        ],
        compiler_params=pltpu.CompilerParams(
            dimension_semantics=("parallel",),
            vmem_limit_bytes=32 * 1024 * 1024,
        ),
    )(*args)


# --------------------------------------------------------------------------
# Parameters (PyTorch-default init, torch layouts) + packing for the kernel.
# --------------------------------------------------------------------------
def init_raw_params(key, num_features, cnn_channels, hidden_size,
                    lstm_hidden_size, kernel_size=3):
    ks = jax.random.split(key, 12)

    def uni(k, shape, fan_in):
        bound = 1.0 / math.sqrt(fan_in)
        return jax.random.uniform(k, shape, jnp.float32, -bound, bound)

    F, C, H, Hl, K = (num_features, cnn_channels, hidden_size,
                      lstm_hidden_size, kernel_size)
    return {
        "conv1_w": uni(ks[0], (C, F, K), F * K),
        "conv1_b": uni(ks[1], (C,), F * K),
        "conv2_w": uni(ks[2], (C, C, K), C * K),
        "conv2_b": uni(ks[3], (C,), C * K),
        "fc_w": uni(ks[4], (H, C), C),
        "fc_b": uni(ks[5], (H,), C),
        "ln1_g": jnp.ones((H,), jnp.float32),
        "ln1_b": jnp.zeros((H,), jnp.float32),
        "w_ih": uni(ks[6], (4 * Hl, H), Hl),
        "b_ih": uni(ks[7], (4 * Hl,), Hl),
        "w_hh": uni(ks[8], (4 * Hl, Hl), Hl),
        "b_hh": uni(ks[9], (4 * Hl,), Hl),
        "ln2_g": jnp.ones((Hl,), jnp.float32),
        "ln2_b": jnp.zeros((Hl,), jnp.float32),
        "fc2_w": uni(ks[10], (H, Hl), Hl),
        "fc2_b": uni(ks[11], (H,), Hl),
    }


def pack_params(raw):
    """Fold eval-mode BatchNorm into the convs, im2col-stack the conv taps,
    pre-transpose matmul weights, pre-add the LSTM biases, and cast the large
    matmul weights to bf16 (accumulation stays f32 in-kernel)."""
    bn_scale = 1.0 / math.sqrt(1.0 + _EPS)   # BN eval: mean=0, var=1, gamma=1, beta=0

    def stack_conv(w):  # torch (Cout, Cin, K) -> (K*Cin, Cout), tap-major rows
        Cout, Cin, K = w.shape
        return jnp.transpose(w, (2, 1, 0)).reshape(K * Cin, Cout)

    return {
        "c1w": (stack_conv(raw["conv1_w"]) * bn_scale).astype(jnp.bfloat16),
        "c1b": (raw["conv1_b"] * bn_scale).reshape(1, -1),
        "c2w": (stack_conv(raw["conv2_w"]) * bn_scale).astype(jnp.bfloat16),
        "c2b": (raw["conv2_b"] * bn_scale).reshape(1, -1),
        "fcw": jnp.transpose(raw["fc_w"]).astype(jnp.bfloat16),
        "fcb": raw["fc_b"].reshape(1, -1),
        "ln1g": raw["ln1_g"].reshape(1, -1),
        "ln1b": raw["ln1_b"].reshape(1, -1),
        "wih": jnp.transpose(raw["w_ih"]).astype(jnp.bfloat16),
        "bsum": (raw["b_ih"] + raw["b_hh"]).reshape(1, -1),
        "whh": jnp.transpose(raw["w_hh"]),       # recurrence stays f32
        "ln2g": raw["ln2_g"].reshape(1, -1),
        "ln2b": raw["ln2_b"].reshape(1, -1),
        "fc2w": jnp.transpose(raw["fc2_w"]),
        "fc2b": raw["fc2_b"].reshape(1, -1),
    }


def reference_forward(x, raw, eps=_EPS):
    """Pure-JAX f32 mirror of the PyTorch module (BatchNorm in eval mode)."""
    B, T, _ = x.shape
    bn_scale = 1.0 / math.sqrt(1.0 + eps)

    def conv_bn_relu(inp, w, b):
        K = w.shape[-1]
        xp = jnp.pad(inp, ((0, 0), (K // 2, K // 2), (0, 0)))
        y = b[None, None, :]
        for k in range(K):
            y = y + jnp.einsum("btc,oc->bto", xp[:, k:k + T, :], w[:, :, k])
        return jnp.maximum(y * bn_scale, 0.0)

    feat = conv_bn_relu(x, raw["conv1_w"], raw["conv1_b"])
    feat = conv_bn_relu(feat, raw["conv2_w"], raw["conv2_b"])

    f2 = feat @ raw["fc_w"].T + raw["fc_b"]
    mu = f2.mean(-1, keepdims=True)
    var = ((f2 - mu) ** 2).mean(-1, keepdims=True)
    f2 = (f2 - mu) / jnp.sqrt(var + eps) * raw["ln1_g"] + raw["ln1_b"]
    f2 = jnp.maximum(f2, 0.0)

    Hl = raw["w_hh"].shape[1]
    h = jnp.zeros((B, Hl), jnp.float32)
    c = jnp.zeros((B, Hl), jnp.float32)
    for t in range(T):
        g = (f2[:, t, :] @ raw["w_ih"].T + raw["b_ih"]
             + h @ raw["w_hh"].T + raw["b_hh"])
        i_g = jax.nn.sigmoid(g[:, 0 * Hl:1 * Hl])
        f_g = jax.nn.sigmoid(g[:, 1 * Hl:2 * Hl])
        g_g = jnp.tanh(g[:, 2 * Hl:3 * Hl])
        o_g = jax.nn.sigmoid(g[:, 3 * Hl:4 * Hl])
        c = f_g * c + i_g * g_g
        h = o_g * jnp.tanh(c)

    mu = h.mean(-1, keepdims=True)
    var = ((h - mu) ** 2).mean(-1, keepdims=True)
    hn = (h - mu) / jnp.sqrt(var + eps) * raw["ln2_g"] + raw["ln2_b"]
    return jnp.maximum(hn @ raw["fc2_w"].T + raw["fc2_b"], 0.0)


if __name__ == "__main__":
    # Small shapes consistent with the module: [B, T, num_features]
    B, T, F = 2, 8, 4
    hidden_size, cnn_channels, lstm_hidden_size = 32, 32, 32

    key = jax.random.PRNGKey(0)
    kx, kp = jax.random.split(key)
    x = jax.random.normal(kx, (B, T, F), jnp.float32)
    raw = init_raw_params(kp, F, cnn_channels, hidden_size, lstm_hidden_size)
    params = pack_params(raw)

    out = jax.block_until_ready(trading_repr_forward(x, params))
    assert out.shape == (B, hidden_size), out.shape
    assert bool(jnp.all(jnp.isfinite(out)))

    # Pure-JAX f32 reference check; tolerance is loose only because the kernel
    # runs its large matmuls in bf16 (f32 accumulation).
    ref = reference_forward(x, raw)
    max_err = float(jnp.max(jnp.abs(out - ref)))
    assert max_err < 0.15, f"kernel vs reference max abs err {max_err}"

    print("KERNEL_OK")
</pallas_src>

<mosaic_0001>
module attributes {stable_mosaic.version = 11 : i64} {
  func.func @_trading_repr_kernel(%arg0: i32, %arg1: memref<8x2x4xf32, #tpu.memory_space<vmem>>, %arg2: memref<12x32xbf16, #tpu.memory_space<vmem>>, %arg3: memref<1x32xf32, #tpu.memory_space<vmem>>, %arg4: memref<96x32xbf16, #tpu.memory_space<vmem>>, %arg5: memref<1x32xf32, #tpu.memory_space<vmem>>, %arg6: memref<32x32xbf16, #tpu.memory_space<vmem>>, %arg7: memref<1x32xf32, #tpu.memory_space<vmem>>, %arg8: memref<1x32xf32, #tpu.memory_space<vmem>>, %arg9: memref<1x32xf32, #tpu.memory_space<vmem>>, %arg10: memref<32x128xbf16, #tpu.memory_space<vmem>>, %arg11: memref<1x128xf32, #tpu.memory_space<vmem>>, %arg12: memref<32x128xf32, #tpu.memory_space<vmem>>, %arg13: memref<1x32xf32, #tpu.memory_space<vmem>>, %arg14: memref<1x32xf32, #tpu.memory_space<vmem>>, %arg15: memref<32x32xf32, #tpu.memory_space<vmem>>, %arg16: memref<1x32xf32, #tpu.memory_space<vmem>>, %arg17: memref<2x32xf32, #tpu.memory_space<vmem>>, %arg18: memref<16x12xf32, #tpu.memory_space<vmem>>, %arg19: memref<16x96xf32, #tpu.memory_space<vmem>>, %arg20: memref<8x2x128xf32, #tpu.memory_space<vmem>>) attributes {dimension_semantics = [#tpu.dimension_semantics<parallel>], iteration_bounds = array<i64: 1>, scalar_prefetch = 0 : i64, scratch_operands = 3 : i64, tpu.core_type = #tpu.core_type<tc>, window_params = [{transform_indices = @transform_0, window_bounds = array<i64: 8, 2, 4>}, {pipeline_mode = #tpu.pipeline_mode<synchronous>, transform_indices = @transform_1, window_bounds = array<i64: 12, 32>}, {pipeline_mode = #tpu.pipeline_mode<synchronous>, transform_indices = @transform_2, window_bounds = array<i64: 1, 32>}, {pipeline_mode = #tpu.pipeline_mode<synchronous>, transform_indices = @transform_3, window_bounds = array<i64: 96, 32>}, {pipeline_mode = #tpu.pipeline_mode<synchronous>, transform_indices = @transform_4, window_bounds = array<i64: 1, 32>}, {pipeline_mode = #tpu.pipeline_mode<synchronous>, transform_indices = @transform_5, window_bounds = array<i64: 32, 32>}, {pipeline_mode = #tpu.pipeline_mode<synchronous>, transform_indices = @transform_6, window_bounds = array<i64: 1, 32>}, {pipeline_mode = #tpu.pipeline_mode<synchronous>, transform_indices = @transform_7, window_bounds = array<i64: 1, 32>}, {pipeline_mode = #tpu.pipeline_mode<synchronous>, transform_indices = @transform_8, window_bounds = array<i64: 1, 32>}, {pipeline_mode = #tpu.pipeline_mode<synchronous>, transform_indices = @transform_9, window_bounds = array<i64: 32, 128>}, {pipeline_mode = #tpu.pipeline_mode<synchronous>, transform_indices = @transform_10, window_bounds = array<i64: 1, 128>}, {pipeline_mode = #tpu.pipeline_mode<synchronous>, transform_indices = @transform_11, window_bounds = array<i64: 32, 128>}, {pipeline_mode = #tpu.pipeline_mode<synchronous>, transform_indices = @transform_12, window_bounds = array<i64: 1, 32>}, {pipeline_mode = #tpu.pipeline_mode<synchronous>, transform_indices = @transform_13, window_bounds = array<i64: 1, 32>}, {pipeline_mode = #tpu.pipeline_mode<synchronous>, transform_indices = @transform_14, window_bounds = array<i64: 32, 32>}, {pipeline_mode = #tpu.pipeline_mode<synchronous>, transform_indices = @transform_15, window_bounds = array<i64: 1, 32>}, {transform_indices = @transform_16, window_bounds = array<i64: 2, 32>}]} {
    %c0 = arith.constant 0 : index
    %c0_0 = arith.constant 0 : index
    %c0_1 = arith.constant 0 : index
    %0 = vector.load %arg1[%c0, %c0_0, %c0_1] : memref<8x2x4xf32, #tpu.memory_space<vmem>>, vector<8x2x4xf32>
    %1 = vector.shape_cast %0 : vector<8x2x4xf32> to vector<16x4xf32>
    %c0_2 = arith.constant 0 : index
    %c4 = arith.constant 4 : index
    %2 = vector.load %arg18[%c0_2, %c4] : memref<16x12xf32, #tpu.memory_space<vmem>>, vector<16x4xf32>
    tpu.vector_store %arg18[%c0_2, %c4], %1 {strides = array<i32>} : memref<16x12xf32, #tpu.memory_space<vmem>>, vector<16x4xf32>,
    %cst = arith.constant 0.000000e+00 : f32
    %3 = vector.broadcast %cst : f32 to vector<2x4xf32>
    %c0_3 = arith.constant 0 : index
    %c0_4 = arith.constant 0 : index
    %4 = vector.load %arg18[%c0_3, %c0_4] : memref<16x12xf32, #tpu.memory_space<vmem>>, vector<2x4xf32>
    tpu.vector_store %arg18[%c0_3, %c0_4], %3 {strides = array<i32>} : memref<16x12xf32, #tpu.memory_space<vmem>>, vector<2x4xf32>,
    %5 = vector.extract_strided_slice %1 {offsets = [0, 0], sizes = [14, 4], strides = [1, 1]} : vector<16x4xf32> to vector<14x4xf32>
    %c2 = arith.constant 2 : index
    %c0_5 = arith.constant 0 : index
    %6 = vector.load %arg18[%c2, %c0_5] : memref<16x12xf32, #tpu.memory_space<vmem>>, vector<14x4xf32>
    tpu.vector_store %arg18[%c2, %c0_5], %5 {strides = array<i32>} : memref<16x12xf32, #tpu.memory_space<vmem>>, vector<14x4xf32>,
    %7 = vector.extract_strided_slice %1 {offsets = [2, 0], sizes = [14, 4], strides = [1, 1]} : vector<16x4xf32> to vector<14x4xf32>
    %c0_6 = arith.constant 0 : index
    %c8 = arith.constant 8 : index
    %8 = vector.load %arg18[%c0_6, %c8] : memref<16x12xf32, #tpu.memory_space<vmem>>, vector<14x4xf32>
    tpu.vector_store %arg18[%c0_6, %c8], %7 {strides = array<i32>} : memref<16x12xf32, #tpu.memory_space<vmem>>, vector<14x4xf32>,
    %cst_7 = arith.constant 0.000000e+00 : f32
    %9 = vector.broadcast %cst_7 : f32 to vector<2x4xf32>
    %c14 = arith.constant 14 : index
    %c8_8 = arith.constant 8 : index
    %10 = vector.load %arg18[%c14, %c8_8] : memref<16x12xf32, #tpu.memory_space<vmem>>, vector<2x4xf32>
    tpu.vector_store %arg18[%c14, %c8_8], %9 {strides = array<i32>} : memref<16x12xf32, #tpu.memory_space<vmem>>, vector<2x4xf32>,
    %c0_9 = arith.constant 0 : index
    %c0_10 = arith.constant 0 : index
    %11 = vector.load %arg18[%c0_9, %c0_10] : memref<16x12xf32, #tpu.memory_space<vmem>>, vector<16x12xf32>
    %12 = arith.truncf %11 : vector<16x12xf32> to vector<16x12xbf16>
    %c0_11 = arith.constant 0 : index
    %c0_12 = arith.constant 0 : index
    %13 = vector.load %arg2[%c0_11, %c0_12] : memref<12x32xbf16, #tpu.memory_space<vmem>>, vector<12x32xbf16>
    %cst_13 = arith.constant dense<0.000000e+00> : vector<16x32xf32>
    %14 = tpu.matmul %12, %13, %cst_13 {dimension_numbers = #tpu.dot_dimension_numbers<[1], [0], [0], [1], [0, 0, 1, 1], [], []>} : vector<16x12xbf16>, vector<12x32xbf16>, vector<16x32xf32> -> vector<16x32xf32>
    %c0_14 = arith.constant 0 : index
    %c0_15 = arith.constant 0 : index
    %15 = vector.load %arg3[%c0_14, %c0_15] : memref<1x32xf32, #tpu.memory_space<vmem>>, vector<1x32xf32>
    %16 = vector.broadcast %15 : vector<1x32xf32> to vector<16x32xf32>
    %17 = arith.addf %14, %16 : vector<16x32xf32>
    %cst_16 = arith.constant 0.000000e+00 : f32
    %18 = vector.broadcast %cst_16 : f32 to vector<16x32xf32>
    %19 = arith.maximumf %17, %18 : vector<16x32xf32>
    %c0_17 = arith.constant 0 : index
    %c32 = arith.constant 32 : index
    %20 = vector.load %arg19[%c0_17, %c32] : memref<16x96xf32, #tpu.memory_space<vmem>>, vector<16x32xf32>
    tpu.vector_store %arg19[%c0_17, %c32], %19 {strides = array<i32>} : memref<16x96xf32, #tpu.memory_space<vmem>>, vector<16x32xf32>,
    %cst_18 = arith.constant 0.000000e+00 : f32
    %21 = vector.broadcast %cst_18 : f32 to vector<2x32xf32>
    %c0_19 = arith.constant 0 : index
    %c0_20 = arith.constant 0 : index
    %22 = vector.load %arg19[%c0_19, %c0_20] : memref<16x96xf32, #tpu.memory_space<vmem>>, vector<2x32xf32>
    tpu.vector_store %arg19[%c0_19, %c0_20], %21 {strides = array<i32>} : memref<16x96xf32, #tpu.memory_space<vmem>>, vector<2x32xf32>,
    %23 = vector.extract_strided_slice %19 {offsets = [0, 0], sizes = [14, 32], strides = [1, 1]} : vector<16x32xf32> to vector<14x32xf32>
    %c2_21 = arith.constant 2 : index
    %c0_22 = arith.constant 0 : index
    %24 = vector.load %arg19[%c2_21, %c0_22] : memref<16x96xf32, #tpu.memory_space<vmem>>, vector<14x32xf32>
    tpu.vector_store %arg19[%c2_21, %c0_22], %23 {strides = array<i32>} : memref<16x96xf32, #tpu.memory_space<vmem>>, vector<14x32xf32>,
    %25 = vector.extract_strided_slice %19 {offsets = [2, 0], sizes = [14, 32], strides = [1, 1]} : vector<16x32xf32> to vector<14x32xf32>
    %c0_23 = arith.constant 0 : index
    %c64 = arith.constant 64 : index
    %26 = vector.load %arg19[%c0_23, %c64] : memref<16x96xf32, #tpu.memory_space<vmem>>, vector<14x32xf32>
    tpu.vector_store %arg19[%c0_23, %c64], %25 {strides = array<i32>} : memref<16x96xf32, #tpu.memory_space<vmem>>, vector<14x32xf32>,
    %cst_24 = arith.constant 0.000000e+00 : f32
    %27 = vector.broadcast %cst_24 : f32 to vector<2x32xf32>
    %c14_25 = arith.constant 14 : index
    %c64_26 = arith.constant 64 : index
    %28 = vector.load %arg19[%c14_25, %c64_26] : memref<16x96xf32, #tpu.memory_space<vmem>>, vector<2x32xf32>
    tpu.vector_store %arg19[%c14_25, %c64_26], %27 {strides = array<i32>} : memref<16x96xf32, #tpu.memory_space<vmem>>, vector<2x32xf32>,
    %c0_27 = arith.constant 0 : index
    %c0_28 = arith.constant 0 : index
    %29 = vector.load %arg19[%c0_27, %c0_28] : memref<16x96xf32, #tpu.memory_space<vmem>>, vector<16x96xf32>
    %30 = arith.truncf %29 : vector<16x96xf32> to vector<16x96xbf16>
    %c0_29 = arith.constant 0 : index
    %c0_30 = arith.constant 0 : index
    %31 = vector.load %arg4[%c0_29, %c0_30] : memref<96x32xbf16, #tpu.memory_space<vmem>>, vector<96x32xbf16>
    %cst_31 = arith.constant dense<0.000000e+00> : vector<16x32xf32>
    %32 = tpu.matmul %30, %31, %cst_31 {dimension_numbers = #tpu.dot_dimension_numbers<[1], [0], [0], [1], [0, 0, 1, 1], [], []>} : vector<16x96xbf16>, vector<96x32xbf16>, vector<16x32xf32> -> vector<16x32xf32>
    %c0_32 = arith.constant 0 : index
    %c0_33 = arith.constant 0 : index
    %33 = vector.load %arg5[%c0_32, %c0_33] : memref<1x32xf32, #tpu.memory_space<vmem>>, vector<1x32xf32>
    %34 = vector.broadcast %33 : vector<1x32xf32> to vector<16x32xf32>
    %35 = arith.addf %32, %34 : vector<16x32xf32>
    %cst_34 = arith.constant 0.000000e+00 : f32
    %36 = vector.broadcast %cst_34 : f32 to vector<16x32xf32>
    %37 = arith.maximumf %35, %36 : vector<16x32xf32>
    %38 = arith.truncf %37 : vector<16x32xf32> to vector<16x32xbf16>
    %c0_35 = arith.constant 0 : index
    %c0_36 = arith.constant 0 : index
    %39 = vector.load %arg6[%c0_35, %c0_36] : memref<32x32xbf16, #tpu.memory_space<vmem>>, vector<32x32xbf16>
    %cst_37 = arith.constant dense<0.000000e+00> : vector<16x32xf32>
    %40 = tpu.matmul %38, %39, %cst_37 {dimension_numbers = #tpu.dot_dimension_numbers<[1], [0], [0], [1], [0, 0, 1, 1], [], []>} : vector<16x32xbf16>, vector<32x32xbf16>, vector<16x32xf32> -> vector<16x32xf32>
    %c0_38 = arith.constant 0 : index
    %c0_39 = arith.constant 0 : index
    %41 = vector.load %arg7[%c0_38, %c0_39] : memref<1x32xf32, #tpu.memory_space<vmem>>, vector<1x32xf32>
    %42 = vector.broadcast %41 : vector<1x32xf32> to vector<16x32xf32>
    %43 = arith.addf %40, %42 : vector<16x32xf32>
    %cst_40 = arith.constant dense<0.000000e+00> : vector<16xf32>
    %44 = vector.multi_reduction <add>, %43, %cst_40 [1] : vector<16x32xf32> to vector<16xf32>
    %45 = vector.shape_cast %44 : vector<16xf32> to vector<16x1xf32>
    %cst_41 = arith.constant 3.200000e+01 : f32
    %46 = vector.broadcast %cst_41 : f32 to vector<16x1xf32>
    %47 = arith.divf %45, %46 : vector<16x1xf32>
    %48 = vector.broadcast %47 : vector<16x1xf32> to vector<16x32xf32>
    %49 = arith.subf %43, %48 : vector<16x32xf32>
    %50 = arith.mulf %49, %49 : vector<16x32xf32>
    %cst_42 = arith.constant dense<0.000000e+00> : vector<16xf32>
    %51 = vector.multi_reduction <add>, %50, %cst_42 [1] : vector<16x32xf32> to vector<16xf32>
    %52 = vector.shape_cast %51 : vector<16xf32> to vector<16x1xf32>
    %cst_43 = arith.constant 3.200000e+01 : f32
    %53 = vector.broadcast %cst_43 : f32 to vector<16x1xf32>
    %54 = arith.divf %52, %53 : vector<16x1xf32>
    %55 = vector.broadcast %47 : vector<16x1xf32> to vector<16x32xf32>
    %56 = arith.subf %43, %55 : vector<16x32xf32>
    %cst_44 = arith.constant 9.99999974E-6 : f32
    %57 = vector.broadcast %cst_44 : f32 to vector<16x1xf32>
    %58 = arith.addf %54, %57 : vector<16x1xf32>
    %59 = math.rsqrt %58 : vector<16x1xf32>
    %60 = vector.broadcast %59 : vector<16x1xf32> to vector<16x32xf32>
    %61 = arith.mulf %56, %60 : vector<16x32xf32>
    %c0_45 = arith.constant 0 : index
    %c0_46 = arith.constant 0 : index
    %62 = vector.load %arg8[%c0_45, %c0_46] : memref<1x32xf32, #tpu.memory_space<vmem>>, vector<1x32xf32>
    %63 = vector.broadcast %62 : vector<1x32xf32> to vector<16x32xf32>
    %64 = arith.mulf %61, %63 : vector<16x32xf32>
    %c0_47 = arith.constant 0 : index
    %c0_48 = arith.constant 0 : index
    %65 = vector.load %arg9[%c0_47, %c0_48] : memref<1x32xf32, #tpu.memory_space<vmem>>, vector<1x32xf32>
    %66 = vector.broadcast %65 : vector<1x32xf32> to vector<16x32xf32>
    %67 = arith.addf %64, %66 : vector<16x32xf32>
    %cst_49 = arith.constant 0.000000e+00 : f32
    %68 = vector.broadcast %cst_49 : f32 to vector<16x32xf32>
    %69 = arith.maximumf %67, %68 : vector<16x32xf32>
    %70 = arith.truncf %69 : vector<16x32xf32> to vector<16x32xbf16>
    %c0_50 = arith.constant 0 : index
    %c0_51 = arith.constant 0 : index
    %71 = vector.load %arg10[%c0_50, %c0_51] : memref<32x128xbf16, #tpu.memory_space<vmem>>, vector<32x128xbf16>
    %cst_52 = arith.constant dense<0.000000e+00> : vector<16x128xf32>
    %72 = tpu.matmul %70, %71, %cst_52 {dimension_numbers = #tpu.dot_dimension_numbers<[1], [0], [0], [1], [0, 0, 1, 1], [], []>} : vector<16x32xbf16>, vector<32x128xbf16>, vector<16x128xf32> -> vector<16x128xf32>
    %c0_53 = arith.constant 0 : index
    %c0_54 = arith.constant 0 : index
    %73 = vector.load %arg11[%c0_53, %c0_54] : memref<1x128xf32, #tpu.memory_space<vmem>>, vector<1x128xf32>
    %74 = vector.broadcast %73 : vector<1x128xf32> to vector<16x128xf32>
    %75 = arith.addf %72, %74 : vector<16x128xf32>
    %76 = vector.shape_cast %75 : vector<16x128xf32> to vector<8x2x128xf32>
    %c0_55 = arith.constant 0 : index
    %c0_56 = arith.constant 0 : index
    %c0_57 = arith.constant 0 : index
    %77 = vector.load %arg20[%c0_55, %c0_56, %c0_57] : memref<8x2x128xf32, #tpu.memory_space<vmem>>, vector<8x2x128xf32>
    tpu.vector_store %arg20[%c0_55, %c0_56, %c0_57], %76 {strides = array<i32>} : memref<8x2x128xf32, #tpu.memory_space<vmem>>, vector<8x2x128xf32>,
    %c0_58 = arith.constant 0 : index
    %c0_59 = arith.constant 0 : index
    %78 = vector.load %arg12[%c0_58, %c0_59] : memref<32x128xf32, #tpu.memory_space<vmem>>, vector<32x128xf32>
    %cst_60 = arith.constant 0.000000e+00 : f32
    %79 = vector.broadcast %cst_60 : f32 to vector<2x32xf32>
    %cst_61 = arith.constant 0.000000e+00 : f32
    %80 = vector.broadcast %cst_61 : f32 to vector<2x32xf32>
    %c0_i32 = arith.constant 0 : i32
    %81 = arith.index_cast %c0_i32 : i32 to index
    %c0_62 = arith.constant 0 : index
    %c0_63 = arith.constant 0 : index
    %82 = vector.load %arg20[%81, %c0_62, %c0_63] : memref<8x2x128xf32, #tpu.memory_space<vmem>>, vector<1x2x128xf32>
    %83 = vector.shape_cast %82 : vector<1x2x128xf32> to vector<2x128xf32>
    %cst_64 = arith.constant dense<0.000000e+00> : vector<2x128xf32>
    %84 = tpu.matmul %79, %78, %cst_64 {dimension_numbers = #tpu.dot_dimension_numbers<[1], [0], [0], [1], [0, 0, 1, 1], [], []>} : vector<2x32xf32>, vector<32x128xf32>, vector<2x128xf32> -> vector<2x128xf32>
    %85 = arith.addf %83, %84 : vector<2x128xf32>
    %86 = arith.negf %85 : vector<2x128xf32>
    %87 = math.exp %86 : vector<2x128xf32>
    %cst_65 = arith.constant 1.000000e+00 : f32
    %88 = vector.broadcast %cst_65 : f32 to vector<2x128xf32>
    %89 = arith.addf %88, %87 : vector<2x128xf32>
    %90 = arith.divf %88, %89 : vector<2x128xf32>
    %91 = math.tanh %85 : vector<2x128xf32>
    %92 = vector.extract_strided_slice %90 {offsets = [0, 0], sizes = [2, 32], strides = [1, 1]} : vector<2x128xf32> to vector<2x32xf32>
    %93 = vector.extract_strided_slice %90 {offsets = [0, 32], sizes = [2, 32], strides = [1, 1]} : vector<2x128xf32> to vector<2x32xf32>
    %94 = vector.extract_strided_slice %91 {offsets = [0, 64], sizes = [2, 32], strides = [1, 1]} : vector<2x128xf32> to vector<2x32xf32>
    %95 = vector.extract_strided_slice %90 {offsets = [0, 96], sizes = [2, 32], strides = [1, 1]} : vector<2x128xf32> to vector<2x32xf32>
    %96 = arith.mulf %93, %80 : vector<2x32xf32>
    %97 = arith.mulf %92, %94 : vector<2x32xf32>
    %98 = arith.addf %96, %97 : vector<2x32xf32>
    %99 = math.tanh %98 : vector<2x32xf32>
    %100 = arith.mulf %95, %99 : vector<2x32xf32>
    %c1_i32 = arith.constant 1 : i32
    %101 = arith.index_cast %c1_i32 : i32 to index
    %c0_66 = arith.constant 0 : index
    %c0_67 = arith.constant 0 : index
    %102 = vector.load %arg20[%101, %c0_66, %c0_67] : memref<8x2x128xf32, #tpu.memory_space<vmem>>, vector<1x2x128xf32>
    %103 = vector.shape_cast %102 : vector<1x2x128xf32> to vector<2x128xf32>
    %cst_68 = arith.constant dense<0.000000e+00> : vector<2x128xf32>
    %104 = tpu.matmul %100, %78, %cst_68 {dimension_numbers = #tpu.dot_dimension_numbers<[1], [0], [0], [1], [0, 0, 1, 1], [], []>} : vector<2x32xf32>, vector<32x128xf32>, vector<2x128xf32> -> vector<2x128xf32>
    %105 = arith.addf %103, %104 : vector<2x128xf32>
    %106 = arith.negf %105 : vector<2x128xf32>
    %107 = math.exp %106 : vector<2x128xf32>
    %cst_69 = arith.constant 1.000000e+00 : f32
    %108 = vector.broadcast %cst_69 : f32 to vector<2x128xf32>
    %109 = arith.addf %108, %107 : vector<2x128xf32>
    %110 = arith.divf %108, %109 : vector<2x128xf32>
    %111 = math.tanh %105 : vector<2x128xf32>
    %112 = vector.extract_strided_slice %110 {offsets = [0, 0], sizes = [2, 32], strides = [1, 1]} : vector<2x128xf32> to vector<2x32xf32>
    %113 = vector.extract_strided_slice %110 {offsets = [0, 32], sizes = [2, 32], strides = [1, 1]} : vector<2x128xf32> to vector<2x32xf32>
    %114 = vector.extract_strided_slice %111 {offsets = [0, 64], sizes = [2, 32], strides = [1, 1]} : vector<2x128xf32> to vector<2x32xf32>
    %115 = vector.extract_strided_slice %110 {offsets = [0, 96], sizes = [2, 32], strides = [1, 1]} : vector<2x128xf32> to vector<2x32xf32>
    %116 = arith.mulf %113, %98 : vector<2x32xf32>
    %117 = arith.mulf %112, %114 : vector<2x32xf32>
    %118 = arith.addf %116, %117 : vector<2x32xf32>
    %119 = math.tanh %118 : vector<2x32xf32>
    %120 = arith.mulf %115, %119 : vector<2x32xf32>
    %c2_i32 = arith.constant 2 : i32
    %121 = arith.index_cast %c2_i32 : i32 to index
    %c0_70 = arith.constant 0 : index
    %c0_71 = arith.constant 0 : index
    %122 = vector.load %arg20[%121, %c0_70, %c0_71] : memref<8x2x128xf32, #tpu.memory_space<vmem>>, vector<1x2x128xf32>
    %123 = vector.shape_cast %122 : vector<1x2x128xf32> to vector<2x128xf32>
    %cst_72 = arith.constant dense<0.000000e+00> : vector<2x128xf32>
    %124 = tpu.matmul %120, %78, %cst_72 {dimension_numbers = #tpu.dot_dimension_numbers<[1], [0], [0], [1], [0, 0, 1, 1], [], []>} : vector<2x32xf32>, vector<32x128xf32>, vector<2x128xf32> -> vector<2x128xf32>
    %125 = arith.addf %123, %124 : vector<2x128xf32>
    %126 = arith.negf %125 : vector<2x128xf32>
    %127 = math.exp %126 : vector<2x128xf32>
    %cst_73 = arith.constant 1.000000e+00 : f32
    %128 = vector.broadcast %cst_73 : f32 to vector<2x128xf32>
    %129 = arith.addf %128, %127 : vector<2x128xf32>
    %130 = arith.divf %128, %129 : vector<2x128xf32>
    %131 = math.tanh %125 : vector<2x128xf32>
    %132 = vector.extract_strided_slice %130 {offsets = [0, 0], sizes = [2, 32], strides = [1, 1]} : vector<2x128xf32> to vector<2x32xf32>
    %133 = vector.extract_strided_slice %130 {offsets = [0, 32], sizes = [2, 32], strides = [1, 1]} : vector<2x128xf32> to vector<2x32xf32>
    %134 = vector.extract_strided_slice %131 {offsets = [0, 64], sizes = [2, 32], strides = [1, 1]} : vector<2x128xf32> to vector<2x32xf32>
    %135 = vector.extract_strided_slice %130 {offsets = [0, 96], sizes = [2, 32], strides = [1, 1]} : vector<2x128xf32> to vector<2x32xf32>
    %136 = arith.mulf %133, %118 : vector<2x32xf32>
    %137 = arith.mulf %132, %134 : vector<2x32xf32>
    %138 = arith.addf %136, %137 : vector<2x32xf32>
    %139 = math.tanh %138 : vector<2x32xf32>
    %140 = arith.mulf %135, %139 : vector<2x32xf32>
    %c3_i32 = arith.constant 3 : i32
    %141 = arith.index_cast %c3_i32 : i32 to index
    %c0_74 = arith.constant 0 : index
    %c0_75 = arith.constant 0 : index
    %142 = vector.load %arg20[%141, %c0_74, %c0_75] : memref<8x2x128xf32, #tpu.memory_space<vmem>>, vector<1x2x128xf32>
    %143 = vector.shape_cast %142 : vector<1x2x128xf32> to vector<2x128xf32>
    %cst_76 = arith.constant dense<0.000000e+00> : vector<2x128xf32>
    %144 = tpu.matmul %140, %78, %cst_76 {dimension_numbers = #tpu.dot_dimension_numbers<[1], [0], [0], [1], [0, 0, 1, 1], [], []>} : vector<2x32xf32>, vector<32x128xf32>, vector<2x128xf32> -> vector<2x128xf32>
    %145 = arith.addf %143, %144 : vector<2x128xf32>
    %146 = arith.negf %145 : vector<2x128xf32>
    %147 = math.exp %146 : vector<2x128xf32>
    %cst_77 = arith.constant 1.000000e+00 : f32
    %148 = vector.broadcast %cst_77 : f32 to vector<2x128xf32>
    %149 = arith.addf %148, %147 : vector<2x128xf32>
    %150 = arith.divf %148, %149 : vector<2x128xf32>
    %151 = math.tanh %145 : vector<2x128xf32>
    %152 = vector.extract_strided_slice %150 {offsets = [0, 0], sizes = [2, 32], strides = [1, 1]} : vector<2x128xf32> to vector<2x32xf32>
    %153 = vector.extract_strided_slice %150 {offsets = [0, 32], sizes = [2, 32], strides = [1, 1]} : vector<2x128xf32> to vector<2x32xf32>
    %154 = vector.extract_strided_slice %151 {offsets = [0, 64], sizes = [2, 32], strides = [1, 1]} : vector<2x128xf32> to vector<2x32xf32>
    %155 = vector.extract_strided_slice %150 {offsets = [0, 96], sizes = [2, 32], strides = [1, 1]} : vector<2x128xf32> to vector<2x32xf32>
    %156 = arith.mulf %153, %138 : vector<2x32xf32>
    %157 = arith.mulf %152, %154 : vector<2x32xf32>
    %158 = arith.addf %156, %157 : vector<2x32xf32>
    %159 = math.tanh %158 : vector<2x32xf32>
    %160 = arith.mulf %155, %159 : vector<2x32xf32>
    %c4_i32 = arith.constant 4 : i32
    %161 = arith.index_cast %c4_i32 : i32 to index
    %c0_78 = arith.constant 0 : index
    %c0_79 = arith.constant 0 : index
    %162 = vector.load %arg20[%161, %c0_78, %c0_79] : memref<8x2x128xf32, #tpu.memory_space<vmem>>, vector<1x2x128xf32>
    %163 = vector.shape_cast %162 : vector<1x2x128xf32> to vector<2x128xf32>
    %cst_80 = arith.constant dense<0.000000e+00> : vector<2x128xf32>
    %164 = tpu.matmul %160, %78, %cst_80 {dimension_numbers = #tpu.dot_dimension_numbers<[1], [0], [0], [1], [0, 0, 1, 1], [], []>} : vector<2x32xf32>, vector<32x128xf32>, vector<2x128xf32> -> vector<2x128xf32>
    %165 = arith.addf %163, %164 : vector<2x128xf32>
    %166 = arith.negf %165 : vector<2x128xf32>
    %167 = math.exp %166 : vector<2x128xf32>
    %cst_81 = arith.constant 1.000000e+00 : f32
    %168 = vector.broadcast %cst_81 : f32 to vector<2x128xf32>
    %169 = arith.addf %168, %167 : vector<2x128xf32>
    %170 = arith.divf %168, %169 : vector<2x128xf32>
    %171 = math.tanh %165 : vector<2x128xf32>
    %172 = vector.extract_strided_slice %170 {offsets = [0, 0], sizes = [2, 32], strides = [1, 1]} : vector<2x128xf32> to vector<2x32xf32>
    %173 = vector.extract_strided_slice %170 {offsets = [0, 32], sizes = [2, 32], strides = [1, 1]} : vector<2x128xf32> to vector<2x32xf32>
    %174 = vector.extract_strided_slice %171 {offsets = [0, 64], sizes = [2, 32], strides = [1, 1]} : vector<2x128xf32> to vector<2x32xf32>
    %175 = vector.extract_strided_slice %170 {offsets = [0, 96], sizes = [2, 32], strides = [1, 1]} : vector<2x128xf32> to vector<2x32xf32>
    %176 = arith.mulf %173, %158 : vector<2x32xf32>
    %177 = arith.mulf %172, %174 : vector<2x32xf32>
    %178 = arith.addf %176, %177 : vector<2x32xf32>
    %179 = math.tanh %178 : vector<2x32xf32>
    %180 = arith.mulf %175, %179 : vector<2x32xf32>
    %c5_i32 = arith.constant 5 : i32
    %181 = arith.index_cast %c5_i32 : i32 to index
    %c0_82 = arith.constant 0 : index
    %c0_83 = arith.constant 0 : index
    %182 = vector.load %arg20[%181, %c0_82, %c0_83] : memref<8x2x128xf32, #tpu.memory_space<vmem>>, vector<1x2x128xf32>
    %183 = vector.shape_cast %182 : vector<1x2x128xf32> to vector<2x128xf32>
    %cst_84 = arith.constant dense<0.000000e+00> : vector<2x128xf32>
    %184 = tpu.matmul %180, %78, %cst_84 {dimension_numbers = #tpu.dot_dimension_numbers<[1], [0], [0], [1], [0, 0, 1, 1], [], []>} : vector<2x32xf32>, vector<32x128xf32>, vector<2x128xf32> -> vector<2x128xf32>
    %185 = arith.addf %183, %184 : vector<2x128xf32>
    %186 = arith.negf %185 : vector<2x128xf32>
    %187 = math.exp %186 : vector<2x128xf32>
    %cst_85 = arith.constant 1.000000e+00 : f32
    %188 = vector.broadcast %cst_85 : f32 to vector<2x128xf32>
    %189 = arith.addf %188, %187 : vector<2x128xf32>
    %190 = arith.divf %188, %189 : vector<2x128xf32>
    %191 = math.tanh %185 : vector<2x128xf32>
    %192 = vector.extract_strided_slice %190 {offsets = [0, 0], sizes = [2, 32], strides = [1, 1]} : vector<2x128xf32> to vector<2x32xf32>
    %193 = vector.extract_strided_slice %190 {offsets = [0, 32], sizes = [2, 32], strides = [1, 1]} : vector<2x128xf32> to vector<2x32xf32>
    %194 = vector.extract_strided_slice %191 {offsets = [0, 64], sizes = [2, 32], strides = [1, 1]} : vector<2x128xf32> to vector<2x32xf32>
    %195 = vector.extract_strided_slice %190 {offsets = [0, 96], sizes = [2, 32], strides = [1, 1]} : vector<2x128xf32> to vector<2x32xf32>
    %196 = arith.mulf %193, %178 : vector<2x32xf32>
    %197 = arith.mulf %192, %194 : vector<2x32xf32>
    %198 = arith.addf %196, %197 : vector<2x32xf32>
    %199 = math.tanh %198 : vector<2x32xf32>
    %200 = arith.mulf %195, %199 : vector<2x32xf32>
    %c6_i32 = arith.constant 6 : i32
    %201 = arith.index_cast %c6_i32 : i32 to index
    %c0_86 = arith.constant 0 : index
    %c0_87 = arith.constant 0 : index
    %202 = vector.load %arg20[%201, %c0_86, %c0_87] : memref<8x2x128xf32, #tpu.memory_space<vmem>>, vector<1x2x128xf32>
    %203 = vector.shape_cast %202 : vector<1x2x128xf32> to vector<2x128xf32>
    %cst_88 = arith.constant dense<0.000000e+00> : vector<2x128xf32>
    %204 = tpu.matmul %200, %78, %cst_88 {dimension_numbers = #tpu.dot_dimension_numbers<[1], [0], [0], [1], [0, 0, 1, 1], [], []>} : vector<2x32xf32>, vector<32x128xf32>, vector<2x128xf32> -> vector<2x128xf32>
    %205 = arith.addf %203, %204 : vector<2x128xf32>
    %206 = arith.negf %205 : vector<2x128xf32>
    %207 = math.exp %206 : vector<2x128xf32>
    %cst_89 = arith.constant 1.000000e+00 : f32
    %208 = vector.broadcast %cst_89 : f32 to vector<2x128xf32>
    %209 = arith.addf %208, %207 : vector<2x128xf32>
    %210 = arith.divf %208, %209 : vector<2x128xf32>
    %211 = math.tanh %205 : vector<2x128xf32>
    %212 = vector.extract_strided_slice %210 {offsets = [0, 0], sizes = [2, 32], strides = [1, 1]} : vector<2x128xf32> to vector<2x32xf32>
    %213 = vector.extract_strided_slice %210 {offsets = [0, 32], sizes = [2, 32], strides = [1, 1]} : vector<2x128xf32> to vector<2x32xf32>
    %214 = vector.extract_strided_slice %211 {offsets = [0, 64], sizes = [2, 32], strides = [1, 1]} : vector<2x128xf32> to vector<2x32xf32>
    %215 = vector.extract_strided_slice %210 {offsets = [0, 96], sizes = [2, 32], strides = [1, 1]} : vector<2x128xf32> to vector<2x32xf32>
    %216 = arith.mulf %213, %198 : vector<2x32xf32>
    %217 = arith.mulf %212, %214 : vector<2x32xf32>
    %218 = arith.addf %216, %217 : vector<2x32xf32>
    %219 = math.tanh %218 : vector<2x32xf32>
    %220 = arith.mulf %215, %219 : vector<2x32xf32>
    %c7_i32 = arith.constant 7 : i32
    %221 = arith.index_cast %c7_i32 : i32 to index
    %c0_90 = arith.constant 0 : index
    %c0_91 = arith.constant 0 : index
    %222 = vector.load %arg20[%221, %c0_90, %c0_91] : memref<8x2x128xf32, #tpu.memory_space<vmem>>, vector<1x2x128xf32>
    %223 = vector.shape_cast %222 : vector<1x2x128xf32> to vector<2x128xf32>
    %cst_92 = arith.constant dense<0.000000e+00> : vector<2x128xf32>
    %224 = tpu.matmul %220, %78, %cst_92 {dimension_numbers = #tpu.dot_dimension_numbers<[1], [0], [0], [1], [0, 0, 1, 1], [], []>} : vector<2x32xf32>, vector<32x128xf32>, vector<2x128xf32> -> vector<2x128xf32>
    %225 = arith.addf %223, %224 : vector<2x128xf32>
    %226 = arith.negf %225 : vector<2x128xf32>
    %227 = math.exp %226 : vector<2x128xf32>
    %cst_93 = arith.constant 1.000000e+00 : f32
    %228 = vector.broadcast %cst_93 : f32 to vector<2x128xf32>
    %229 = arith.addf %228, %227 : vector<2x128xf32>
    %230 = arith.divf %228, %229 : vector<2x128xf32>
    %231 = math.tanh %225 : vector<2x128xf32>
    %232 = vector.extract_strided_slice %230 {offsets = [0, 0], sizes = [2, 32], strides = [1, 1]} : vector<2x128xf32> to vector<2x32xf32>
    %233 = vector.extract_strided_slice %230 {offsets = [0, 32], sizes = [2, 32], strides = [1, 1]} : vector<2x128xf32> to vector<2x32xf32>
    %234 = vector.extract_strided_slice %231 {offsets = [0, 64], sizes = [2, 32], strides = [1, 1]} : vector<2x128xf32> to vector<2x32xf32>
    %235 = vector.extract_strided_slice %230 {offsets = [0, 96], sizes = [2, 32], strides = [1, 1]} : vector<2x128xf32> to vector<2x32xf32>
    %236 = arith.mulf %233, %218 : vector<2x32xf32>
    %237 = arith.mulf %232, %234 : vector<2x32xf32>
    %238 = arith.addf %236, %237 : vector<2x32xf32>
    %239 = math.tanh %238 : vector<2x32xf32>
    %240 = arith.mulf %235, %239 : vector<2x32xf32>
    %c8_i32 = arith.constant 8 : i32
    %cst_94 = arith.constant dense<0.000000e+00> : vector<2xf32>
    %241 = vector.multi_reduction <add>, %240, %cst_94 [1] : vector<2x32xf32> to vector<2xf32>
    %242 = vector.shape_cast %241 : vector<2xf32> to vector<2x1xf32>
    %cst_95 = arith.constant 3.200000e+01 : f32
    %243 = vector.broadcast %cst_95 : f32 to vector<2x1xf32>
    %244 = arith.divf %242, %243 : vector<2x1xf32>
    %245 = vector.broadcast %244 : vector<2x1xf32> to vector<2x32xf32>
    %246 = arith.subf %240, %245 : vector<2x32xf32>
    %247 = arith.mulf %246, %246 : vector<2x32xf32>
    %cst_96 = arith.constant dense<0.000000e+00> : vector<2xf32>
    %248 = vector.multi_reduction <add>, %247, %cst_96 [1] : vector<2x32xf32> to vector<2xf32>
    %249 = vector.shape_cast %248 : vector<2xf32> to vector<2x1xf32>
    %cst_97 = arith.constant 3.200000e+01 : f32
    %250 = vector.broadcast %cst_97 : f32 to vector<2x1xf32>
    %251 = arith.divf %249, %250 : vector<2x1xf32>
    %252 = vector.broadcast %244 : vector<2x1xf32> to vector<2x32xf32>
    %253 = arith.subf %240, %252 : vector<2x32xf32>
    %cst_98 = arith.constant 9.99999974E-6 : f32
    %254 = vector.broadcast %cst_98 : f32 to vector<2x1xf32>
    %255 = arith.addf %251, %254 : vector<2x1xf32>
    %256 = math.rsqrt %255 : vector<2x1xf32>
    %257 = vector.broadcast %256 : vector<2x1xf32> to vector<2x32xf32>
    %258 = arith.mulf %253, %257 : vector<2x32xf32>
    %c0_99 = arith.constant 0 : index
    %c0_100 = arith.constant 0 : index
    %259 = vector.load %arg13[%c0_99, %c0_100] : memref<1x32xf32, #tpu.memory_space<vmem>>, vector<1x32xf32>
    %260 = vector.broadcast %259 : vector<1x32xf32> to vector<2x32xf32>
    %261 = arith.mulf %258, %260 : vector<2x32xf32>
    %c0_101 = arith.constant 0 : index
    %c0_102 = arith.constant 0 : index
    %262 = vector.load %arg14[%c0_101, %c0_102] : memref<1x32xf32, #tpu.memory_space<vmem>>, vector<1x32xf32>
    %263 = vector.broadcast %262 : vector<1x32xf32> to vector<2x32xf32>
    %264 = arith.addf %261, %263 : vector<2x32xf32>
    %c0_103 = arith.constant 0 : index
    %c0_104 = arith.constant 0 : index
    %265 = vector.load %arg15[%c0_103, %c0_104] : memref<32x32xf32, #tpu.memory_space<vmem>>, vector<32x32xf32>
    %cst_105 = arith.constant dense<0.000000e+00> : vector<2x32xf32>
    %266 = tpu.matmul %264, %265, %cst_105 {dimension_numbers = #tpu.dot_dimension_numbers<[1], [0], [0], [1], [0, 0, 1, 1], [], []>} : vector<2x32xf32>, vector<32x32xf32>, vector<2x32xf32> -> vector<2x32xf32>
    %c0_106 = arith.constant 0 : index
    %c0_107 = arith.constant 0 : index
    %267 = vector.load %arg16[%c0_106, %c0_107] : memref<1x32xf32, #tpu.memory_space<vmem>>, vector<1x32xf32>
    %268 = vector.broadcast %267 : vector<1x32xf32> to vector<2x32xf32>
    %269 = arith.addf %266, %268 : vector<2x32xf32>
    %cst_108 = arith.constant 0.000000e+00 : f32
    %270 = vector.broadcast %cst_108 : f32 to vector<2x32xf32>
    %271 = arith.maximumf %269, %270 : vector<2x32xf32>
    %c0_109 = arith.constant 0 : index
    %c0_110 = arith.constant 0 : index
    %272 = vector.load %arg17[%c0_109, %c0_110] : memref<2x32xf32, #tpu.memory_space<vmem>>, vector<2x32xf32>
    tpu.vector_store %arg17[%c0_109, %c0_110], %271 {strides = array<i32>} : memref<2x32xf32, #tpu.memory_space<vmem>>, vector<2x32xf32>,
    return
  }
  func.func @transform_0(%arg0: i32) -> (i32, i32, i32) {
    %c0_i32 = arith.constant 0 : i32
    %c0_i32_0 = arith.constant 0 : i32
    %c0_i32_1 = arith.constant 0 : i32
    return %c0_i32, %arg0, %c0_i32_0 : i32, i32, i32
  }
  func.func @transform_1(%arg0: i32) -> (i32, i32) {
    %c0_i32 = arith.constant 0 : i32
    %c0_i32_0 = arith.constant 0 : i32
    %c0_i32_1 = arith.constant 0 : i32
    return %c0_i32, %c0_i32_0 : i32, i32
  }
  func.func @transform_2(%arg0: i32) -> (i32, i32) {
    %c0_i32 = arith.constant 0 : i32
    %c0_i32_0 = arith.constant 0 : i32
    %c0_i32_1 = arith.constant 0 : i32
    return %c0_i32, %c0_i32_0 : i32, i32
  }
  func.func @transform_3(%arg0: i32) -> (i32, i32) {
    %c0_i32 = arith.constant 0 : i32
    %c0_i32_0 = arith.constant 0 : i32
    %c0_i32_1 = arith.constant 0 : i32
    return %c0_i32, %c0_i32_0 : i32, i32
  }
  func.func @transform_4(%arg0: i32) -> (i32, i32) {
    %c0_i32 = arith.constant 0 : i32
    %c0_i32_0 = arith.constant 0 : i32
    %c0_i32_1 = arith.constant 0 : i32
    return %c0_i32, %c0_i32_0 : i32, i32
  }
  func.func @transform_5(%arg0: i32) -> (i32, i32) {
    %c0_i32 = arith.constant 0 : i32
    %c0_i32_0 = arith.constant 0 : i32
    %c0_i32_1 = arith.constant 0 : i32
    return %c0_i32, %c0_i32_0 : i32, i32
  }
  func.func @transform_6(%arg0: i32) -> (i32, i32) {
    %c0_i32 = arith.constant 0 : i32
    %c0_i32_0 = arith.constant 0 : i32
    %c0_i32_1 = arith.constant 0 : i32
    return %c0_i32, %c0_i32_0 : i32, i32
  }
  func.func @transform_7(%arg0: i32) -> (i32, i32) {
    %c0_i32 = arith.constant 0 : i32
    %c0_i32_0 = arith.constant 0 : i32
    %c0_i32_1 = arith.constant 0 : i32
    return %c0_i32, %c0_i32_0 : i32, i32
  }
  func.func @transform_8(%arg0: i32) -> (i32, i32) {
    %c0_i32 = arith.constant 0 : i32
    %c0_i32_0 = arith.constant 0 : i32
    %c0_i32_1 = arith.constant 0 : i32
    return %c0_i32, %c0_i32_0 : i32, i32
  }
  func.func @transform_9(%arg0: i32) -> (i32, i32) {
    %c0_i32 = arith.constant 0 : i32
    %c0_i32_0 = arith.constant 0 : i32
    %c0_i32_1 = arith.constant 0 : i32
    return %c0_i32, %c0_i32_0 : i32, i32
  }
  func.func @transform_10(%arg0: i32) -> (i32, i32) {
    %c0_i32 = arith.constant 0 : i32
    %c0_i32_0 = arith.constant 0 : i32
    %c0_i32_1 = arith.constant 0 : i32
    return %c0_i32, %c0_i32_0 : i32, i32
  }
  func.func @transform_11(%arg0: i32) -> (i32, i32) {
    %c0_i32 = arith.constant 0 : i32
    %c0_i32_0 = arith.constant 0 : i32
    %c0_i32_1 = arith.constant 0 : i32
    return %c0_i32, %c0_i32_0 : i32, i32
  }
  func.func @transform_12(%arg0: i32) -> (i32, i32) {
    %c0_i32 = arith.constant 0 : i32
    %c0_i32_0 = arith.constant 0 : i32
    %c0_i32_1 = arith.constant 0 : i32
    return %c0_i32, %c0_i32_0 : i32, i32
  }
  func.func @transform_13(%arg0: i32) -> (i32, i32) {
    %c0_i32 = arith.constant 0 : i32
    %c0_i32_0 = arith.constant 0 : i32
    %c0_i32_1 = arith.constant 0 : i32
    return %c0_i32, %c0_i32_0 : i32, i32
  }
  func.func @transform_14(%arg0: i32) -> (i32, i32) {
    %c0_i32 = arith.constant 0 : i32
    %c0_i32_0 = arith.constant 0 : i32
    %c0_i32_1 = arith.constant 0 : i32
    return %c0_i32, %c0_i32_0 : i32, i32
  }
  func.func @transform_15(%arg0: i32) -> (i32, i32) {
    %c0_i32 = arith.constant 0 : i32
    %c0_i32_0 = arith.constant 0 : i32
    %c0_i32_1 = arith.constant 0 : i32
    return %c0_i32, %c0_i32_0 : i32, i32
  }
  func.func @transform_16(%arg0: i32) -> (i32, i32) {
    %c0_i32 = arith.constant 0 : i32
    %c0_i32_0 = arith.constant 0 : i32
    return %arg0, %c0_i32 : i32, i32
  }
}

</mosaic_0001>

<llo_original>
// kernel: tpu_custom_call.1
$region0: #{tpu_custom_call.1}
  #allocation0 [shape = 'u32[]', space=smem, size = 0x4, offset = 0x4, fixed_abs, tag = 'smem constant byte address 0x4 - core index']
  #allocation1 [shape = 'u32[144,128]{1,0:T(1,128)}', space=vmem, size = 0x12000, scoped, tag = 'internal scratch']
  #allocation2 [shape = 'f32[16,12]{1,0:T(8,128)}', space=vmem, size = 0x2000, scoped, tag = 'scratch operand']
  #allocation3 [shape = 'f32[16,96]{1,0:T(8,128)}', space=vmem, size = 0x2000, scoped, tag = 'scratch operand']
  #allocation4 [shape = 'f32[8,2,128]{2,1,0:T(2,128)}', space=vmem, size = 0x2000, scoped, tag = 'scratch operand']
  %s0 = inlined_call_operand.vmem [shape: f32[8,2,4], index: 0, kind: input, shape index: {}]
  %s1 = inlined_call_operand.hbm [shape: bf16[12,32], index: 1, kind: input, shape index: {}]
  %s2 = inlined_call_operand.vmem [shape: f32[1,32], index: 2, kind: input, shape index: {}]
  %s3 = inlined_call_operand.vmem [shape: bf16[96,32], index: 3, kind: input, shape index: {}]
  %s4 = inlined_call_operand.vmem [shape: f32[1,32], index: 4, kind: input, shape index: {}]
  %s5 = inlined_call_operand.vmem [shape: bf16[32,32], index: 5, kind: input, shape index: {}]
  %s6 = inlined_call_operand.vmem [shape: f32[1,32], index: 6, kind: input, shape index: {}]
  %s7 = inlined_call_operand.vmem [shape: f32[1,32], index: 7, kind: input, shape index: {}]
  %s8 = inlined_call_operand.vmem [shape: f32[1,32], index: 8, kind: input, shape index: {}]
  %s9 = inlined_call_operand.vmem [shape: bf16[32,128], index: 9, kind: input, shape index: {}]
  %s10 = inlined_call_operand.vmem [shape: f32[1,128], index: 10, kind: input, shape index: {}]
  %s11 = inlined_call_operand.vmem [shape: f32[32,128], index: 11, kind: input, shape index: {}]
  %s12 = inlined_call_operand.vmem [shape: f32[1,32], index: 12, kind: input, shape index: {}]
  %s13 = inlined_call_operand.vmem [shape: f32[1,32], index: 13, kind: input, shape index: {}]
  %s14 = inlined_call_operand.vmem [shape: f32[32,32], index: 14, kind: input, shape index: {}]
  %s15 = inlined_call_operand.vmem [shape: f32[1,32], index: 15, kind: input, shape index: {}]
  %s16 = inlined_call_operand.hbm [shape: f32[2,32], index: 16, kind: output, shape index: {}]
  %s17 = sld [smem:[#allocation0]]
  $region78: #{tpu_custom_call.1} parent=0
    _
  %s19 = ssub.s32 1, %s17
  %s20 = scalar_select 0, %s19, %s17
  $region1: #{tpu_custom_call.1} parent=0
    #allocation5 [shape = 'u8[4096]{0}', space=vmem, size = 0x1000, scoped, tag = 'input window, operand 1, single buffered']
    #allocation6 [shape = 's32[1]{0}', space=sflag, size = 0x4, scoped, tag = 'scoped memory for tpu_custom_call.1']
    #allocation7 [shape = 's32[1]{0}', space=sflag, size = 0x4, scoped, tag = 'scoped memory for tpu_custom_call.1']
    #allocation8 [shape = 'u8[1024]{0}', space=vmem, size = 0x400, scoped, tag = 'output window, operand 0, single buffered']
    %21 = vsyncpa [#allocation6], 0
    %22 = vsyncpa [#allocation7], 0
    // Predicated region
    $region2: #{tpu_custom_call.1} parent=1 // pred_check
      _
    $region3: #{tpu_custom_call.1} parent=1 // pred_check_branch
      %24 = sbr.rel (0) target = $region5
    $region4: #{tpu_custom_call.1} parent=1 // pred_region
      _
    $region5: #{tpu_custom_call.1} parent=1 // pred_fallthru
      _
    // Predicated region
    $region6: #{tpu_custom_call.1} parent=1 // pred_check
      _
    $region7: #{tpu_custom_call.1} parent=1 // pred_check_branch
      %26 = sbr.rel (0) target = $region9
    $region8: #{tpu_custom_call.1} parent=1 // pred_region
      %s28 = ssub.s32 128, 128
      %29 = vsyncadd [#allocation6], %s28
      %s30 = sshll.u32 [#allocation5], 4
      %s31 = int_to_ptr.vmem [resolvable:$true] %s30
      %36 = dma.hbm_to_vmem [thread:$0]  %s1, 128, %s31, [#allocation6], 64, 64, 4
    $region9: #{tpu_custom_call.1} parent=1 // pred_fallthru
      _
    // Predicated region
    $region10: #{tpu_custom_call.1} parent=1 // pred_check
      _
    $region11: #{tpu_custom_call.1} parent=1 // pred_check_branch
      %38 = sbr.rel (0) target = $region13
    $region12: #{tpu_custom_call.1} parent=1 // pred_region
      _
    $region13: #{tpu_custom_call.1} parent=1 // pred_fallthru
      _
    // Predicated region
    $region14: #{tpu_custom_call.1} parent=1 // pred_check
      _
    $region15: #{tpu_custom_call.1} parent=1 // pred_check_branch
      %40 = sbr.rel (0) target = $region17
    $region16: #{tpu_custom_call.1} parent=1 // pred_region
      _
    $region17: #{tpu_custom_call.1} parent=1 // pred_fallthru
      _
    // Predicated region
    $region18: #{tpu_custom_call.1} parent=1 // pred_check
      _
    $region19: #{tpu_custom_call.1} parent=1 // pred_check_branch
      %42 = sbr.rel (0) target = $region21
    $region20: #{tpu_custom_call.1} parent=1 // pred_region
      _
    $region21: #{tpu_custom_call.1} parent=1 // pred_fallthru
      _
    // Predicated region
    $region22: #{tpu_custom_call.1} parent=1 // pred_check
      _
    $region23: #{tpu_custom_call.1} parent=1 // pred_check_branch
      %44 = sbr.rel (0) target = $region25
    $region24: #{tpu_custom_call.1} parent=1 // pred_region
      _
    $region25: #{tpu_custom_call.1} parent=1 // pred_fallthru
      _
    // Predicated region
    $region26: #{tpu_custom_call.1} parent=1 // pred_check
      _
    $region27: #{tpu_custom_call.1} parent=1 // pred_check_branch
      %46 = sbr.rel (0) target = $region29
    $region28: #{tpu_custom_call.1} parent=1 // pred_region
      _
    $region29: #{tpu_custom_call.1} parent=1 // pred_fallthru
      _
    // Predicated region
    $region30: #{tpu_custom_call.1} parent=1 // pred_check
      _
    $region31: #{tpu_custom_call.1} parent=1 // pred_check_branch
      %48 = sbr.rel (0) target = $region33
    $region32: #{tpu_custom_call.1} parent=1 // pred_region
      _
    $region33: #{tpu_custom_call.1} parent=1 // pred_fallthru
      _
    // Predicated region
    $region34: #{tpu_custom_call.1} parent=1 // pred_check
      _
    $region35: #{tpu_custom_call.1} parent=1 // pred_check_branch
      %50 = sbr.rel (0) target = $region37
    $region36: #{tpu_custom_call.1} parent=1 // pred_region
      _
    $region37: #{tpu_custom_call.1} parent=1 // pred_fallthru
      _
    // Predicated region
    $region38: #{tpu_custom_call.1} parent=1 // pred_check
      _
    $region39: #{tpu_custom_call.1} parent=1 // pred_check_branch
      %52 = sbr.rel (0) target = $region41
    $region40: #{tpu_custom_call.1} parent=1 // pred_region
      _
    $region41: #{tpu_custom_call.1} parent=1 // pred_fallthru
      _
    // Predicated region
    $region42: #{tpu_custom_call.1} parent=1 // pred_check
      _
    $region43: #{tpu_custom_call.1} parent=1 // pred_check_branch
      %54 = sbr.rel (0) target = $region45
    $region44: #{tpu_custom_call.1} parent=1 // pred_region
      _
    $region45: #{tpu_custom_call.1} parent=1 // pred_fallthru
      _
    // Predicated region
    $region46: #{tpu_custom_call.1} parent=1 // pred_check
      _
    $region47: #{tpu_custom_call.1} parent=1 // pred_check_branch
      %56 = sbr.rel (0) target = $region49
    $region48: #{tpu_custom_call.1} parent=1 // pred_region
      _
    $region49: #{tpu_custom_call.1} parent=1 // pred_fallthru
      _
    // Predicated region
    $region50: #{tpu_custom_call.1} parent=1 // pred_check
      _
    $region51: #{tpu_custom_call.1} parent=1 // pred_check_branch
      %58 = sbr.rel (0) target = $region53
    $region52: #{tpu_custom_call.1} parent=1 // pred_region
      _
    $region53: #{tpu_custom_call.1} parent=1 // pred_fallthru
      _
    // Predicated region
    $region54: #{tpu_custom_call.1} parent=1 // pred_check
      _
    $region55: #{tpu_custom_call.1} parent=1 // pred_check_branch
      %60 = sbr.rel (0) target = $region57
    $region56: #{tpu_custom_call.1} parent=1 // pred_region
      _
    $region57: #{tpu_custom_call.1} parent=1 // pred_fallthru
      _
    // Predicated region
    $region58: #{tpu_custom_call.1} parent=1 // pred_check
      _
    $region59: #{tpu_custom_call.1} parent=1 // pred_check_branch
      %62 = sbr.rel (0) target = $region61
    $region60: #{tpu_custom_call.1} parent=1 // pred_region
      _
    $region61: #{tpu_custom_call.1} parent=1 // pred_fallthru
      _
    // Predicated region
    $region62: #{tpu_custom_call.1} parent=1 // pred_check
      _
    $region63: #{tpu_custom_call.1} parent=1 // pred_check_branch
      %64 = sbr.rel (0) target = $region65
    $region64: #{tpu_custom_call.1} parent=1 // pred_region
      _
    $region65: #{tpu_custom_call.1} parent=1 // pred_fallthru
      _
    // Predicated region
    $region66: #{tpu_custom_call.1} parent=1 // pred_check
      _
    $region67: #{tpu_custom_call.1} parent=1 // pred_check_branch
      %66 = sbr.rel (0) target = $region69
    $region68: #{tpu_custom_call.1} parent=1 // pred_region
      %67 = dma.done [#allocation6], 128
    $region69: #{tpu_custom_call.1} parent=1 // pred_fallthru
      _
    %v69 = vld [vmem:[%s0] sm:$0x3]
    %v70 = vld [vmem:[%s0 + $0x2] sm:$0x3]
    %v71 = vld [vmem:[%s0 + $0x4] sm:$0x3]
    %v72 = vld [vmem:[%s0 + $0x6] sm:$0x3]
    %v73 = vld [vmem:[%s0 + $0x8] sm:$0x3]
    %v74 = vld [vmem:[%s0 + $0xa] sm:$0x3]
    %v75 = vld [vmem:[%s0 + $0xc] sm:$0x3]
    %v76 = vld [vmem:[%s0 + $0xe] sm:$0x3]
    %v85 = vcombine.low %v69, %v70
    %v86 = vcombine.low %v71, %v72
    %v88 = vunpack.c.l.s4 1983009808
    %v89 = vunpack.c.0.s8 %v88
    %v90 = vlaneseq
    %v91 = vshrl.u32 %v90, 7
    %v92 = vsub.s32 %v89, %v91
    %v93 = vrot.slane %v85, %v92
    %v95 = vunpack.c.l.s4 1983009808
    %v96 = vunpack.c.0.s8 %v95
    %v97 = vlaneseq
    %v98 = vshrl.u32 %v97, 7
    %v99 = vsub.s32 %v96, %v98
    %v100 = vrot.slane %v86, %v99
    %v101 = vcombine.low %v93, %v100
    %v102 = vcombine.low %v73, %v74
    %v103 = vcombine.low %v75, %v76
    %v105 = vunpack.c.l.s4 1983009808
    %v106 = vunpack.c.0.s8 %v105
    %v107 = vlaneseq
    %v108 = vshrl.u32 %v107, 7
    %v109 = vsub.s32 %v106, %v108
    %v110 = vrot.slane %v102, %v109
    %v112 = vunpack.c.l.s4 1983009808
    %v113 = vunpack.c.0.s8 %v112
    %v114 = vlaneseq
    %v115 = vshrl.u32 %v114, 7
    %v116 = vsub.s32 %v113, %v115
    %v117 = vrot.slane %v103, %v116
    %v118 = vcombine.low %v110, %v117
    %119 = vrot.lane.b32.xlu0 %v101, 4
    %v120 = vpop.permute.xlu0 %119
    %121 = vrot.lane.b32.xlu0 %v118, 4
    %v122 = vpop.permute.xlu0 %121
    %vm125 = vcmask 64544
    %126 = vst.msk [vmem:[#allocation2] sm:$0xff] %vm125, %v120
    %127 = vst.msk [vmem:[#allocation2 + $0x8] sm:$0xff] %vm125, %v122
    %vm128 = vcmask 25600
    %129 = vst.msk [vmem:[#allocation2] sm:$0x3] %vm128, 0.0
    %v131 = vunpack.c.l.s4 1983009808
    %v132 = vunpack.c.0.s8 %v131
    %v133 = vlaneseq
    %v134 = vshrl.u32 %v133, 7
    %v135 = vsub.s32 %v132, %v134
    %v136 = vrot.slane %v75, %v135
    %v137 = vcombine.low %v110, %v136
    %vm140 = vcmask 31744
    %141 = vst.msk [vmem:[#allocation2 + $0x2] sm:$0xff] %vm140, %v101
    %vm142 = vcmask 29696
    %143 = vst.msk [vmem:[#allocation2 + $0xa] sm:$0x3f] %vm142, %v137
    %v144 = vcombine.low %v70, %v71
    %v145 = vcombine.low %v72, %v73
    %v147 = vunpack.c.l.s4 1983009808
    %v148 = vunpack.c.0.s8 %v147
    %v149 = vlaneseq
    %v150 = vshrl.u32 %v149, 7
    %v151 = vsub.s32 %v148, %v150
    %v152 = vrot.slane %v144, %v151
    %v154 = vunpack.c.l.s4 1983009808
    %v155 = vunpack.c.0.s8 %v154
    %v156 = vlaneseq
    %v157 = vshrl.u32 %v156, 7
    %v158 = vsub.s32 %v155, %v157
    %v159 = vrot.slane %v145, %v158
    %v160 = vcombine.low %v152, %v159
    %v161 = vcombine.low %v74, %v75
    %v163 = vunpack.c.l.s4 1983009808
    %v164 = vunpack.c.0.s8 %v163
    %v165 = vlaneseq
    %v166 = vshrl.u32 %v165, 7
    %v167 = vsub.s32 %v164, %v166
    %v168 = vrot.slane %v161, %v167
    %v170 = vunpack.c.l.s4 1983009808
    %v171 = vunpack.c.0.s8 %v170
    %v172 = vlaneseq
    %v173 = vshrl.u32 %v172, 7
    %v174 = vsub.s32 %v171, %v173
    %v175 = vrot.slane %v76, %v174
    %v176 = vcombine.low %v168, %v175
    %177 = vrot.lane.b32.xlu0 %v160, 8
    %v178 = vpop.permute.xlu0 %177
    %179 = vrot.lane.b32.xlu0 %v176, 8
    %v180 = vpop.permute.xlu0 %179
    %vm183 = vcmask 97344
    %184 = vst.msk [vmem:[#allocation2] sm:$0xff] %vm183, %v178
    %vm185 = vcmask 95296
    %186 = vst.msk [vmem:[#allocation2 + $0x8] sm:$0x3f] %vm185, %v180
    %vm187 = vcmask 91200
    %188 = vst.msk [vmem:[#allocation2 + $0xe] sm:$0x3] %vm187, 0.0
    %v189 = vld [vmem:[#allocation2] sm:$0xff]
    %v190 = vld [vmem:[#allocation2 + $0x8] sm:$0xff]
    %v191 = vpack.c.bf16 %v190, %v189
    %v192 = vld [vmem:[#allocation5] sm:$0xf]
    %v193 = vld [vmem:[#allocation5 + $0x4] sm:$0x3]
    %v194 = vld [vmem:[%s2] sm:$0x1]
    %v196 = vlaneseq
    %v197 = vshrl.u32 %v196, 7
    %v198 = vsub.s32 0, %v197
    %v199 = vrot.slane %v194, %v198
    %v203 = vunpack.c.l.b16 %v192
    %v204 = vunpack.c.l.b16 %v193
    %v205 = vpack.c.b16 %v204, %v203
    %vm206 = vcmask 97280
    %v208 = vsel %vm206, %v191, 0
    %vm210 = vcmask 1045504
    %v212 = vsel %vm210, %v205, 0
    %214 = vmatprep.subr.bf16.mxu0 0
    %215 = vmatpush1.bf16.msra.mxu0 %v212
    %216 = vmatprep.subr.bf16.mxu0 0
    %217 = vmatpush1.bf16.msra.mxu0 0
    %218 = vmatprep.subr.bf16.mxu0 0
    %219 = vmatpush1.bf16.msra.mxu0 0
    %220 = vmatprep.subr.bf16.mxu0 0
    %221 = vmatpush1.bf16.msra.mxu0 0
    %222 = vmatprep.subr.bf16.mxu0 0
    %223 = vmatpush1.bf16.msra.mxu0 0
    %224 = vmatprep.subr.bf16.mxu0 0
    %225 = vmatpush1.bf16.msra.mxu0 0
    %226 = vmatprep.subr.bf16.mxu0 0
    %227 = vmatpush1.bf16.msra.mxu0 0
    %228 = vmatprep.subr.bf16.mxu0 0
    %229 = vmatpush1.bf16.msra.mxu0 0
    %230 = vmatprep.subr.bf16.mxu0 0
    %231 = vmatpush1.bf16.msra.mxu0 0
    %232 = vmatprep.subr.bf16.mxu0 0
    %233 = vmatpush1.bf16.msra.mxu0 0
    %234 = vmatprep.subr.bf16.mxu0 0
    %235 = vmatpush1.bf16.msra.mxu0 0
    %236 = vmatprep.subr.bf16.mxu0 0
    %237 = vmatpush1.bf16.msra.mxu0 0
    %238 = vmatprep.subr.bf16.mxu0 0
    %239 = vmatpush1.bf16.msra.mxu0 0
    %240 = vmatprep.subr.bf16.mxu0 0
    %241 = vmatpush1.bf16.msra.mxu0 0
    %242 = vmatprep.subr.bf16.mxu0 0
    %243 = vmatpush1.bf16.msra.mxu0 0
    %244 = vmatprep.subr.bf16.mxu0 0
    %245 = vmatpush1.bf16.msra.mxu0 0
    %246 = vmatprep.mubr.bf16.mxu0 0
    %247 = vmatmul.mubr.bf16.gmra.mrb[0].mxu0 %v208
    %v248 = vpop.f32.mrb[0].mxu0
    %v249 = vadd.f32 %v199, %v248
    %v250 = vpop.f32.mrb[0].mxu0
    %v251 = vpop.f32.mrb[0].mxu0
    %v252 = vadd.f32 %v199, %v251
    %v253 = vpop.f32.mrb[0].mxu0
    %254 = vdwg.mxu0
    %v255 = vmax.f32 %v249, 0.0
    %v256 = vmax.f32 %v252, 0.0
    %259 = vrot.lane.b32.xlu0 %v255, 32
    %v260 = vpop.permute.xlu0 %259
    %261 = vrot.lane.b32.xlu0 %v256, 32
    %v262 = vpop.permute.xlu0 %261
    %vm265 = vcmask 523520
    %266 = vst.msk [vmem:[#allocation3] sm:$0xff] %vm265, %v260
    %267 = vst.msk [vmem:[#allocation3 + $0x8] sm:$0xff] %vm265, %v262
    %vm268 = vcmask 254976
    %269 = vst.msk [vmem:[#allocation3] sm:$0x3] %vm268, 0.0
    %vm270 = vcmask 261120
    %271 = vst.msk [vmem:[#allocation3 + $0x2] sm:$0xff] %vm270, %v255
    %vm272 = vcmask 259072
    %273 = vst.msk [vmem:[#allocation3 + $0xa] sm:$0x3f] %vm272, %v256
    %274 = vrot.lane.b32.xlu0 %v255, 64
    %v275 = vpop.permute.xlu0 %274
    %276 = vrot.lane.b32.xlu0 %v256, 64
    %v277 = vpop.permute.xlu0 %276
    %vm280 = vcmask 785922
    %281 = vst.msk [vmem:[#allocation3 - $0x2] sm:$0xfc] %vm280, %v275
    %vm282 = vcmask 785920
    %283 = vst.msk [vmem:[#allocation3 + $0x6] sm:$0xff] %vm282, %v277
    %vm284 = vcmask 779776
    %285 = vst.msk [vmem:[#allocation3 + $0xe] sm:$0x3] %vm284, 0.0
    %v286 = vld [vmem:[#allocation3] sm:$0xff]
    %v287 = vld [vmem:[#allocation3 + $0x8] sm:$0xff]
    %v288 = vpack.c.bf16 %v287, %v286
    %v289 = vld [vmem:[%s3] sm:$0xf]
    %v290 = vld [vmem:[%s3 + $0x4] sm:$0xf]
    %v291 = vld [vmem:[%s3 + $0x8] sm:$0xf]
    %v292 = vld [vmem:[%s3 + $0xc] sm:$0xf]
    %v293 = vld [vmem:[%s3 + $0x10] sm:$0xf]
    %v294 = vld [vmem:[%s3 + $0x14] sm:$0xf]
    %v295 = vld [vmem:[%s3 + $0x18] sm:$0xf]
    %v296 = vld [vmem:[%s3 + $0x1c] sm:$0xf]
    %v297 = vld [vmem:[%s3 + $0x20] sm:$0xf]
    %v298 = vld [vmem:[%s3 + $0x24] sm:$0xf]
    %v299 = vld [vmem:[%s3 + $0x28] sm:$0xf]
    %v300 = vld [vmem:[%s3 + $0x2c] sm:$0xf]
    %v301 = vld [vmem:[%s4] sm:$0x1]
    %v303 = vlaneseq
    %v304 = vshrl.u32 %v303, 7
    %v305 = vsub.s32 0, %v304
    %v306 = vrot.slane %v301, %v305
    %v320 = vunpack.c.l.b16 %v289
    %v321 = vunpack.c.l.b16 %v290
    %v322 = vunpack.c.l.b16 %v291
    %v323 = vunpack.c.l.b16 %v292
    %v324 = vunpack.c.l.b16 %v293
    %v325 = vunpack.c.l.b16 %v294
    %v326 = vunpack.c.l.b16 %v295
    %v327 = vunpack.c.l.b16 %v296
    %v328 = vunpack.c.l.b16 %v297
    %v329 = vunpack.c.l.b16 %v298
    %v330 = vunpack.c.l.b16 %v299
    %v331 = vunpack.c.l.b16 %v300
    %v332 = vpack.c.b16 %v321, %v320
    %v333 = vpack.c.b16 %v323, %v322
    %v334 = vpack.c.b16 %v325, %v324
    %v335 = vpack.c.b16 %v327, %v326
    %v336 = vpack.c.b16 %v329, %v328
    %v337 = vpack.c.b16 %v331, %v330
    %vm344 = vcmask 785408
    %v346 = vsel %vm344, %v288, 0
    %348 = vmatprep.subr.bf16.mxu0 0
    %349 = vmatpush1.bf16.msra.mxu0 %v332
    %350 = vmatprep.subr.bf16.mxu0 0
    %351 = vmatpush1.bf16.msra.mxu0 %v333
    %352 = vmatprep.subr.bf16.mxu0 0
    %353 = vmatpush1.bf16.msra.mxu0 %v334
    %354 = vmatprep.subr.bf16.mxu0 0
    %355 = vmatpush1.bf16.msra.mxu0 %v335
    %356 = vmatprep.subr.bf16.mxu0 0
    %357 = vmatpush1.bf16.msra.mxu0 %v336
    %358 = vmatprep.subr.bf16.mxu0 0
    %359 = vmatpush1.bf16.msra.mxu0 %v337
    %360 = vmatprep.subr.bf16.mxu0 0
    %361 = vmatpush1.bf16.msra.mxu0 0
    %362 = vmatprep.subr.bf16.mxu0 0
    %363 = vmatpush1.bf16.msra.mxu0 0
    %364 = vmatprep.subr.bf16.mxu0 0
    %365 = vmatpush1.bf16.msra.mxu0 0
    %366 = vmatprep.subr.bf16.mxu0 0
    %367 = vmatpush1.bf16.msra.mxu0 0
    %368 = vmatprep.subr.bf16.mxu0 0
    %369 = vmatpush1.bf16.msra.mxu0 0
    %370 = vmatprep.subr.bf16.mxu0 0
    %371 = vmatpush1.bf16.msra.mxu0 0
    %372 = vmatprep.subr.bf16.mxu0 0
    %373 = vmatpush1.bf16.msra.mxu0 0
    %374 = vmatprep.subr.bf16.mxu0 0
    %375 = vmatpush1.bf16.msra.mxu0 0
    %376 = vmatprep.subr.bf16.mxu0 0
    %377 = vmatpush1.bf16.msra.mxu0 0
    %378 = vmatprep.subr.bf16.mxu0 0
    %379 = vmatpush1.bf16.msra.mxu0 0
    %380 = vmatprep.mubr.bf16.mxu0 0
    %381 = vmatmul.mubr.bf16.gmra.mrb[0].mxu0 %v346
    %v382 = vpop.f32.mrb[0].mxu0
    %v383 = vadd.f32 %v306, %v382
    %v384 = vpop.f32.mrb[0].mxu0
    %v385 = vpop.f32.mrb[0].mxu0
    %v386 = vadd.f32 %v306, %v385
    %v387 = vpop.f32.mrb[0].mxu0
    %388 = vdwg.mxu0
    %v389 = vmax.f32 %v383, 0.0
    %v390 = vmax.f32 %v386, 0.0
    %v391 = vpack.c.bf16 %v390, %v389
    %v392 = vld [vmem:[%s5] sm:$0xf]
    %v393 = vld [vmem:[%s5 + $0x4] sm:$0xf]
    %v394 = vld [vmem:[%s5 + $0x8] sm:$0xf]
    %v395 = vld [vmem:[%s5 + $0xc] sm:$0xf]
    %v396 = vld [vmem:[%s6] sm:$0x1]
    %v398 = vlaneseq
    %v399 = vshrl.u32 %v398, 7
    %v400 = vsub.s32 0, %v399
    %v401 = vrot.slane %v396, %v400
    %v407 = vunpack.c.l.b16 %v392
    %v408 = vunpack.c.l.b16 %v393
    %v409 = vunpack.c.l.b16 %v394
    %v410 = vunpack.c.l.b16 %v395
    %v411 = vpack.c.b16 %v408, %v407
    %v412 = vpack.c.b16 %v410, %v409
    %v416 = vsel %vm270, %v391, 0
    %418 = vmatprep.subr.bf16.mxu0 0
    %419 = vmatpush1.bf16.msra.mxu0 %v411
    %420 = vmatprep.subr.bf16.mxu0 0
    %421 = vmatpush1.bf16.msra.mxu0 %v412
    %422 = vmatprep.subr.bf16.mxu0 0
    %423 = vmatpush1.bf16.msra.mxu0 0
    %424 = vmatprep.subr.bf16.mxu0 0
    %425 = vmatpush1.bf16.msra.mxu0 0
    %426 = vmatprep.subr.bf16.mxu0 0
    %427 = vmatpush1.bf16.msra.mxu0 0
    %428 = vmatprep.subr.bf16.mxu0 0
    %429 = vmatpush1.bf16.msra.mxu0 0
    %430 = vmatprep.subr.bf16.mxu0 0
    %431 = vmatpush1.bf16.msra.mxu0 0
    %432 = vmatprep.subr.bf16.mxu0 0
    %433 = vmatpush1.bf16.msra.mxu0 0
    %434 = vmatprep.subr.bf16.mxu0 0
    %435 = vmatpush1.bf16.msra.mxu0 0
    %436 = vmatprep.subr.bf16.mxu0 0
    %437 = vmatpush1.bf16.msra.mxu0 0
    %438 = vmatprep.subr.bf16.mxu0 0
    %439 = vmatpush1.bf16.msra.mxu0 0
    %440 = vmatprep.subr.bf16.mxu0 0
    %441 = vmatpush1.bf16.msra.mxu0 0
    %442 = vmatprep.subr.bf16.mxu0 0
    %443 = vmatpush1.bf16.msra.mxu0 0
    %444 = vmatprep.subr.bf16.mxu0 0
    %445 = vmatpush1.bf16.msra.mxu0 0
    %446 = vmatprep.subr.bf16.mxu0 0
    %447 = vmatpush1.bf16.msra.mxu0 0
    %448 = vmatprep.subr.bf16.mxu0 0
    %449 = vmatpush1.bf16.msra.mxu0 0
    %450 = vmatprep.mubr.bf16.mxu0 0
    %451 = vmatmul.mubr.bf16.gmra.mrb[0].mxu0 %v416
    %v452 = vpop.f32.mrb[0].mxu0
    %v453 = vadd.f32 %v401, %v452
    %v454 = vpop.f32.mrb[0].mxu0
    %v455 = vpop.f32.mrb[0].mxu0
    %v456 = vadd.f32 %v401, %v455
    %v457 = vpop.f32.mrb[0].mxu0
    %458 = vdwg.mxu0
    %v459 = vsel %vm270, %v453, 0.0
    %460 = vadd.xlane.f32.xlu0 %v459
    %v461 = vpop.xlane.xlu0 %460
    %v462 = vsel %vm270, %v456, 0.0
    %463 = vadd.xlane.f32.xlu0 %v462
    %v464 = vpop.xlane.xlu0 %463
    %v465 = vrcp.pop 32.0
    %v466 = vmul.f32 %v461, %v465
    %v467 = vmul.f32 %v464, %v465
    %v468 = vsub.f32 %v453, %v466
    %v469 = vsub.f32 %v456, %v467
    %v470 = vmul.f32 %v468, %v468
    %v471 = vmul.f32 %v469, %v469
    %v472 = vsel %vm270, %v470, 0.0
    %473 = vadd.xlane.f32.xlu0 %v472
    %v474 = vpop.xlane.xlu0 %473
    %v475 = vsel %vm270, %v471, 0.0
    %476 = vadd.xlane.f32.xlu0 %v475
    %v477 = vpop.xlane.xlu0 %476
    %v478 = vmul.f32 %v474, %v465
    %v479 = vmul.f32 %v477, %v465
    %v480 = vadd.f32 %v478, 1e-05
    %v481 = vadd.f32 %v479, 1e-05
    %v482 = vrsqrt.pop %v480
    %v483 = vrsqrt.pop %v481
    %v484 = vmul.f32 %v468, %v482
    %v485 = vmul.f32 %v469, %v483
    %v486 = vld [vmem:[%s7] sm:$0x1]
    %v488 = vlaneseq
    %v489 = vshrl.u32 %v488, 7
    %v490 = vsub.s32 0, %v489
    %v491 = vrot.slane %v486, %v490
    %v493 = vmul.f32 %v484, %v491
    %v494 = vmul.f32 %v485, %v491
    %v495 = vld [vmem:[%s8] sm:$0x1]
    %v497 = vlaneseq
    %v498 = vshrl.u32 %v497, 7
    %v499 = vsub.s32 0, %v498
    %v500 = vrot.slane %v495, %v499
    %v502 = vadd.f32 %v493, %v500
    %v503 = vadd.f32 %v494, %v500
    %v504 = vmax.f32 %v502, 0.0
    %v505 = vmax.f32 %v503, 0.0
    %v506 = vpack.c.bf16 %v505, %v504
    %v507 = vld [vmem:[%s9] sm:$0xf]
    %v508 = vld [vmem:[%s9 + $0x4] sm:$0xf]
    %v509 = vld [vmem:[%s9 + $0x8] sm:$0xf]
    %v510 = vld [vmem:[%s9 + $0xc] sm:$0xf]
    %v511 = vld [vmem:[%s10] sm:$0x1]
    %v513 = vlaneseq
    %v514 = vshrl.u32 %v513, 7
    %v515 = vsub.s32 0, %v514
    %v516 = vrot.slane %v511, %v515
    %v522 = vunpack.c.l.b16 %v507
    %v523 = vunpack.c.l.b16 %v508
    %v524 = vunpack.c.l.b16 %v509
    %v525 = vunpack.c.l.b16 %v510
    %v526 = vpack.c.b16 %v523, %v522
    %v527 = vpack.c.b16 %v525, %v524
    %v531 = vsel %vm270, %v506, 0
    %533 = vmatprep.subr.bf16.mxu0 0
    %534 = vmatpush1.bf16.msra.mxu0 %v526
    %535 = vmatprep.subr.bf16.mxu0 0
    %536 = vmatpush1.bf16.msra.mxu0 %v527
    %537 = vmatprep.subr.bf16.mxu0 0
    %538 = vmatpush1.bf16.msra.mxu0 0
    %539 = vmatprep.subr.bf16.mxu0 0
    %540 = vmatpush1.bf16.msra.mxu0 0
    %541 = vmatprep.subr.bf16.mxu0 0
    %542 = vmatpush1.bf16.msra.mxu0 0
    %543 = vmatprep.subr.bf16.mxu0 0
    %544 = vmatpush1.bf16.msra.mxu0 0
    %545 = vmatprep.subr.bf16.mxu0 0
    %546 = vmatpush1.bf16.msra.mxu0 0
    %547 = vmatprep.subr.bf16.mxu0 0
    %548 = vmatpush1.bf16.msra.mxu0 0
    %549 = vmatprep.subr.bf16.mxu0 0
    %550 = vmatpush1.bf16.msra.mxu0 0
    %551 = vmatprep.subr.bf16.mxu0 0
    %552 = vmatpush1.bf16.msra.mxu0 0
    %553 = vmatprep.subr.bf16.mxu0 0
    %554 = vmatpush1.bf16.msra.mxu0 0
    %555 = vmatprep.subr.bf16.mxu0 0
    %556 = vmatpush1.bf16.msra.mxu0 0
    %557 = vmatprep.subr.bf16.mxu0 0
    %558 = vmatpush1.bf16.msra.mxu0 0
    %559 = vmatprep.subr.bf16.mxu0 0
    %560 = vmatpush1.bf16.msra.mxu0 0
    %561 = vmatprep.subr.bf16.mxu0 0
    %562 = vmatpush1.bf16.msra.mxu0 0
    %563 = vmatprep.subr.bf16.mxu0 0
    %564 = vmatpush1.bf16.msra.mxu0 0
    %565 = vmatprep.mubr.bf16.mxu0 0
    %566 = vmatmul.mubr.bf16.gmra.mrb[0].mxu0 %v531
    %v567 = vpop.f32.mrb[0].mxu0
    %v568 = vadd.f32 %v516, %v567
    %v569 = vpop.f32.mrb[0].mxu0
    %v570 = vpop.f32.mrb[0].mxu0
    %v571 = vadd.f32 %v516, %v570
    %v572 = vpop.f32.mrb[0].mxu0
    %573 = vdwg.mxu0
    %v576 = vcombine.high %v568, %v568
    %v578 = vunpack.c.l.s4 1983009808
    %v579 = vunpack.c.0.s8 %v578
    %v580 = vlaneseq
    %v581 = vshrl.u32 %v580, 7
    %v582 = vsub.s32 %v579, %v581
    %v583 = vrot.slane %v568, %v582
    %v585 = vunpack.c.l.s4 1983009808
    %v586 = vunpack.c.0.s8 %v585
    %v587 = vlaneseq
    %v588 = vshrl.u32 %v587, 7
    %v589 = vsub.s32 %v586, %v588
    %v590 = vrot.slane %v576, %v589
    %v591 = vcombine.high %v583, %v583
    %v592 = vcombine.high %v590, %v590
    %v593 = vcombine.high %v571, %v571
    %v595 = vunpack.c.l.s4 1983009808
    %v596 = vunpack.c.0.s8 %v595
    %v597 = vlaneseq
    %v598 = vshrl.u32 %v597, 7
    %v599 = vsub.s32 %v596, %v598
    %v600 = vrot.slane %v571, %v599
    %v602 = vunpack.c.l.s4 1983009808
    %v603 = vunpack.c.0.s8 %v602
    %v604 = vlaneseq
    %v605 = vshrl.u32 %v604, 7
    %v606 = vsub.s32 %v603, %v605
    %v607 = vrot.slane %v593, %v606
    %v608 = vcombine.high %v600, %v600
    %v609 = vcombine.high %v607, %v607
    %618 = vst [vmem:[#allocation4] sm:$0x3] %v583
    %619 = vst [vmem:[#allocation4 + $0x2] sm:$0x3] %v591
    %620 = vst [vmem:[#allocation4 + $0x4] sm:$0x3] %v590
    %621 = vst [vmem:[#allocation4 + $0x6] sm:$0x3] %v592
    %622 = vst [vmem:[#allocation4 + $0x8] sm:$0x3] %v600
    %623 = vst [vmem:[#allocation4 + $0xa] sm:$0x3] %v608
    %624 = vst [vmem:[#allocation4 + $0xc] sm:$0x3] %v607
    %625 = vst [vmem:[#allocation4 + $0xe] sm:$0x3] %v609
    %v626 = vld [vmem:[%s11] sm:$0xff]
    %v627 = vld [vmem:[%s11 + $0x8] sm:$0xff]
    %v628 = vld [vmem:[%s11 + $0x10] sm:$0xff]
    %v629 = vld [vmem:[%s11 + $0x18] sm:$0xff]
    %v630 = vld [vmem:[#allocation4] sm:$0x3]
    %v632 = vsel %vm270, 0.0, 0
    %634 = vmatprep.subr.mxu0 0.0
    %635 = vmatpush1.msra.mxu0 %v626
    %636 = vmatprep.subr.mxu0 0.0
    %637 = vmatpush1.msra.mxu0 %v627
    %638 = vmatprep.subr.mxu0 0.0
    %639 = vmatpush1.msra.mxu0 %v628
    %640 = vmatprep.subr.mxu0 0.0
    %641 = vmatpush1.msra.mxu0 %v629
    %642 = vmatprep.subr.mxu0 0.0
    %643 = vmatpush1.msra.mxu0 0.0
    %644 = vmatprep.subr.mxu0 0.0
    %645 = vmatpush1.msra.mxu0 0.0
    %646 = vmatprep.subr.mxu0 0.0
    %647 = vmatpush1.msra.mxu0 0.0
    %648 = vmatprep.subr.mxu0 0.0
    %649 = vmatpush1.msra.mxu0 0.0
    %650 = vmatprep.subr.mxu0 0.0
    %651 = vmatpush1.msra.mxu0 0.0
    %652 = vmatprep.subr.mxu0 0.0
    %653 = vmatpush1.msra.mxu0 0.0
    %654 = vmatprep.subr.mxu0 0.0
    %655 = vmatpush1.msra.mxu0 0.0
    %656 = vmatprep.subr.mxu0 0.0
    %657 = vmatpush1.msra.mxu0 0.0
    %658 = vmatprep.subr.mxu0 0.0
    %659 = vmatpush1.msra.mxu0 0.0
    %660 = vmatprep.subr.mxu0 0.0
    %661 = vmatpush1.msra.mxu0 0.0
    %662 = vmatprep.subr.mxu0 0.0
    %663 = vmatpush1.msra.mxu0 0.0
    %664 = vmatprep.subr.mxu0 0.0
    %665 = vmatpush1.msra.mxu0 0.0
    %666 = vmatprep.subr.mxu0 0.0
    %667 = vmatpush1.msra.mxu0 0.0
    %668 = vmatprep.subr.mxu0 0.0
    %669 = vmatpush1.msra.mxu0 0.0
    %670 = vmatprep.subr.mxu0 0.0
    %671 = vmatpush1.msra.mxu0 0.0
    %672 = vmatprep.subr.mxu0 0.0
    %673 = vmatpush1.msra.mxu0 0.0
    %674 = vmatprep.subr.mxu0 0.0
    %675 = vmatpush1.msra.mxu0 0.0
    %676 = vmatprep.subr.mxu0 0.0
    %677 = vmatpush1.msra.mxu0 0.0
    %678 = vmatprep.subr.mxu0 0.0
    %679 = vmatpush1.msra.mxu0 0.0
    %680 = vmatprep.subr.mxu0 0.0
    %681 = vmatpush1.msra.mxu0 0.0
    %682 = vmatprep.subr.mxu0 0.0
    %683 = vmatpush1.msra.mxu0 0.0
    %684 = vmatprep.subr.mxu0 0.0
    %685 = vmatpush1.msra.mxu0 0.0
    %686 = vmatprep.subr.mxu0 0.0
    %687 = vmatpush1.msra.mxu0 0.0
    %688 = vmatprep.subr.mxu0 0.0
    %689 = vmatpush1.msra.mxu0 0.0
    %690 = vmatprep.subr.mxu0 0.0
    %691 = vmatpush1.msra.mxu0 0.0
    %692 = vmatprep.subr.mxu0 0.0
    %693 = vmatpush1.msra.mxu0 0.0
    %694 = vmatprep.subr.mxu0 0.0
    %695 = vmatpush1.msra.mxu0 0.0
    %696 = vmatprep.subr.mxu0 0.0
    %697 = vmatpush1.msra.mxu0 0.0
    %698 = vmatprep.mubr.f32.mxu0 0.0
    %699 = vmatmul.mubr.f32.gmra.mrb[0].mxu0 %v632
    %v700 = vpop.f32.mrb[0].mxu0
    %v701 = vadd.f32 0.0, %v700
    %v702 = vpop.f32.mrb[0].mxu0
    %703 = vdwg.mxu0
    %v704 = vadd.f32 %v630, %v701
    %v705 = vxor.u32 %v704, 2147483648
    %v706 = vmul.f32 %v705, 1.442695
    %v707 = vpow.pop %v706
    %v708 = vadd.f32 %v707, 1.0
    %v709 = vrcp.pop %v708
    %v710 = vmul.f32 1.0, %v709
    %v711 = vtanh.pop %v704
    %v712 = vmul.f32 %v710, 0.0
    %714 = vrot.lane.b32.xlu0 %v711, 64
    %v715 = vpop.permute.xlu0 %714
    %v717 = vmul.f32 %v710, %v715
    %719 = vrot.lane.b32.xlu0 %v717, 32
    %v720 = vpop.permute.xlu0 %719
    %v722 = vadd.f32 %v712, %v720
    %v723 = vtanh.pop %v722
    %725 = vrot.lane.b32.xlu0 %v723, 64
    %v726 = vpop.permute.xlu0 %725
    %v728 = vmul.f32 %v710, %v726
    %s729 = scalar_lea.vmem [#allocation4], 2
    %v730 = vld [vmem:[%s729] sm:$0x3]
    %732 = vrot.lane.b32.xlu0 %v728, 32
    %v733 = vpop.permute.xlu0 %732
    %v734 = vsel %vm270, %v733, 0
    %736 = vmatprep.subr.mxu0 0.0
    %737 = vmatpush1.msra.mxu0 %v626
    %738 = vmatprep.subr.mxu0 0.0
    %739 = vmatpush1.msra.mxu0 %v627
    %740 = vmatprep.subr.mxu0 0.0
    %741 = vmatpush1.msra.mxu0 %v628
    %742 = vmatprep.subr.mxu0 0.0
    %743 = vmatpush1.msra.mxu0 %v629
    %744 = vmatprep.subr.mxu0 0.0
    %745 = vmatpush1.msra.mxu0 0.0
    %746 = vmatprep.subr.mxu0 0.0
    %747 = vmatpush1.msra.mxu0 0.0
    %748 = vmatprep.subr.mxu0 0.0
    %749 = vmatpush1.msra.mxu0 0.0
    %750 = vmatprep.subr.mxu0 0.0
    %751 = vmatpush1.msra.mxu0 0.0
    %752 = vmatprep.subr.mxu0 0.0
    %753 = vmatpush1.msra.mxu0 0.0
    %754 = vmatprep.subr.mxu0 0.0
    %755 = vmatpush1.msra.mxu0 0.0
    %756 = vmatprep.subr.mxu0 0.0
    %757 = vmatpush1.msra.mxu0 0.0
    %758 = vmatprep.subr.mxu0 0.0
    %759 = vmatpush1.msra.mxu0 0.0
    %760 = vmatprep.subr.mxu0 0.0
    %761 = vmatpush1.msra.mxu0 0.0
    %762 = vmatprep.subr.mxu0 0.0
    %763 = vmatpush1.msra.mxu0 0.0
    %764 = vmatprep.subr.mxu0 0.0
    %765 = vmatpush1.msra.mxu0 0.0
    %766 = vmatprep.subr.mxu0 0.0
    %767 = vmatpush1.msra.mxu0 0.0
    %768 = vmatprep.subr.mxu0 0.0
    %769 = vmatpush1.msra.mxu0 0.0
    %770 = vmatprep.subr.mxu0 0.0
    %771 = vmatpush1.msra.mxu0 0.0
    %772 = vmatprep.subr.mxu0 0.0
    %773 = vmatpush1.msra.mxu0 0.0
    %774 = vmatprep.subr.mxu0 0.0
    %775 = vmatpush1.msra.mxu0 0.0
    %776 = vmatprep.subr.mxu0 0.0
    %777 = vmatpush1.msra.mxu0 0.0
    %778 = vmatprep.subr.mxu0 0.0
    %779 = vmatpush1.msra.mxu0 0.0
    %780 = vmatprep.subr.mxu0 0.0
    %781 = vmatpush1.msra.mxu0 0.0
    %782 = vmatprep.subr.mxu0 0.0
    %783 = vmatpush1.msra.mxu0 0.0
    %784 = vmatprep.subr.mxu0 0.0
    %785 = vmatpush1.msra.mxu0 0.0
    %786 = vmatprep.subr.mxu0 0.0
    %787 = vmatpush1.msra.mxu0 0.0
    %788 = vmatprep.subr.mxu0 0.0
    %789 = vmatpush1.msra.mxu0 0.0
    %790 = vmatprep.subr.mxu0 0.0
    %791 = vmatpush1.msra.mxu0 0.0
    %792 = vmatprep.subr.mxu0 0.0
    %793 = vmatpush1.msra.mxu0 0.0
    %794 = vmatprep.subr.mxu0 0.0
    %795 = vmatpush1.msra.mxu0 0.0
    %796 = vmatprep.subr.mxu0 0.0
    %797 = vmatpush1.msra.mxu0 0.0
    %798 = vmatprep.subr.mxu0 0.0
    %799 = vmatpush1.msra.mxu0 0.0
    %800 = vmatprep.mubr.f32.mxu0 0.0
    %801 = vmatmul.mubr.f32.gmra.mrb[0].mxu0 %v734
    %v802 = vpop.f32.mrb[0].mxu0
    %v803 = vadd.f32 0.0, %v802
    %v804 = vpop.f32.mrb[0].mxu0
    %805 = vdwg.mxu0
    %v806 = vadd.f32 %v730, %v803
    %v807 = vxor.u32 %v806, 2147483648
    %v808 = vmul.f32 %v807, 1.442695
    %v809 = vpow.pop %v808
    %v810 = vadd.f32 %v809, 1.0
    %v811 = vrcp.pop %v810
    %v812 = vmul.f32 1.0, %v811
    %v813 = vtanh.pop %v806
    %v814 = vmul.f32 %v812, %v722
    %816 = vrot.lane.b32.xlu0 %v813, 64
    %v817 = vpop.permute.xlu0 %816
    %v819 = vmul.f32 %v812, %v817
    %821 = vrot.lane.b32.xlu0 %v819, 32
    %v822 = vpop.permute.xlu0 %821
    %v824 = vadd.f32 %v814, %v822
    %v825 = vtanh.pop %v824
    %827 = vrot.lane.b32.xlu0 %v825, 64
    %v828 = vpop.permute.xlu0 %827
    %v830 = vmul.f32 %v812, %v828
    %s831 = scalar_lea.vmem [#allocation4], 4
    %v832 = vld [vmem:[%s831] sm:$0x3]
    %834 = vrot.lane.b32.xlu0 %v830, 32
    %v835 = vpop.permute.xlu0 %834
    %v836 = vsel %vm270, %v835, 0
    %838 = vmatprep.subr.mxu0 0.0
    %839 = vmatpush1.msra.mxu0 %v626
    %840 = vmatprep.subr.mxu0 0.0
    %841 = vmatpush1.msra.mxu0 %v627
    %842 = vmatprep.subr.mxu0 0.0
    %843 = vmatpush1.msra.mxu0 %v628
    %844 = vmatprep.subr.mxu0 0.0
    %845 = vmatpush1.msra.mxu0 %v629
    %846 = vmatprep.subr.mxu0 0.0
    %847 = vmatpush1.msra.mxu0 0.0
    %848 = vmatprep.subr.mxu0 0.0
    %849 = vmatpush1.msra.mxu0 0.0
    %850 = vmatprep.subr.mxu0 0.0
    %851 = vmatpush1.msra.mxu0 0.0
    %852 = vmatprep.subr.mxu0 0.0
    %853 = vmatpush1.msra.mxu0 0.0
    %854 = vmatprep.subr.mxu0 0.0
    %855 = vmatpush1.msra.mxu0 0.0
    %856 = vmatprep.subr.mxu0 0.0
    %857 = vmatpush1.msra.mxu0 0.0
    %858 = vmatprep.subr.mxu0 0.0
    %859 = vmatpush1.msra.mxu0 0.0
    %860 = vmatprep.subr.mxu0 0.0
    %861 = vmatpush1.msra.mxu0 0.0
    %862 = vmatprep.subr.mxu0 0.0
    %863 = vmatpush1.msra.mxu0 0.0
    %864 = vmatprep.subr.mxu0 0.0
    %865 = vmatpush1.msra.mxu0 0.0
    %866 = vmatprep.subr.mxu0 0.0
    %867 = vmatpush1.msra.mxu0 0.0
    %868 = vmatprep.subr.mxu0 0.0
    %869 = vmatpush1.msra.mxu0 0.0
    %870 = vmatprep.subr.mxu0 0.0
    %871 = vmatpush1.msra.mxu0 0.0
    %872 = vmatprep.subr.mxu0 0.0
    %873 = vmatpush1.msra.mxu0 0.0
    %874 = vmatprep.subr.mxu0 0.0
    %875 = vmatpush1.msra.mxu0 0.0
    %876 = vmatprep.subr.mxu0 0.0
    %877 = vmatpush1.msra.mxu0 0.0
    %878 = vmatprep.subr.mxu0 0.0
    %879 = vmatpush1.msra.mxu0 0.0
    %880 = vmatprep.subr.mxu0 0.0
    %881 = vmatpush1.msra.mxu0 0.0
    %882 = vmatprep.subr.mxu0 0.0
    %883 = vmatpush1.msra.mxu0 0.0
    %884 = vmatprep.subr.mxu0 0.0
    %885 = vmatpush1.msra.mxu0 0.0
    %886 = vmatprep.subr.mxu0 0.0
    %887 = vmatpush1.msra.mxu0 0.0
    %888 = vmatprep.subr.mxu0 0.0
    %889 = vmatpush1.msra.mxu0 0.0
    %890 = vmatprep.subr.mxu0 0.0
    %891 = vmatpush1.msra.mxu0 0.0
    %892 = vmatprep.subr.mxu0 0.0
    %893 = vmatpush1.msra.mxu0 0.0
    %894 = vmatprep.subr.mxu0 0.0
    %895 = vmatpush1.msra.mxu0 0.0
    %896 = vmatprep.subr.mxu0 0.0
    %897 = vmatpush1.msra.mxu0 0.0
    %898 = vmatprep.subr.mxu0 0.0
    %899 = vmatpush1.msra.mxu0 0.0
    %900 = vmatprep.subr.mxu0 0.0
    %901 = vmatpush1.msra.mxu0 0.0
    %902 = vmatprep.mubr.f32.mxu0 0.0
    %903 = vmatmul.mubr.f32.gmra.mrb[0].mxu0 %v836
    %v904 = vpop.f32.mrb[0].mxu0
    %v905 = vadd.f32 0.0, %v904
    %v906 = vpop.f32.mrb[0].mxu0
    %907 = vdwg.mxu0
    %v908 = vadd.f32 %v832, %v905
    %v909 = vxor.u32 %v908, 2147483648
    %v910 = vmul.f32 %v909, 1.442695
    %v911 = vpow.pop %v910
    %v912 = vadd.f32 %v911, 1.0
    %v913 = vrcp.pop %v912
    %v914 = vmul.f32 1.0, %v913
    %v915 = vtanh.pop %v908
    %v916 = vmul.f32 %v914, %v824
    %918 = vrot.lane.b32.xlu0 %v915, 64
    %v919 = vpop.permute.xlu0 %918
    %v921 = vmul.f32 %v914, %v919
    %923 = vrot.lane.b32.xlu0 %v921, 32
    %v924 = vpop.permute.xlu0 %923
    %v926 = vadd.f32 %v916, %v924
    %v927 = vtanh.pop %v926
    %929 = vrot.lane.b32.xlu0 %v927, 64
    %v930 = vpop.permute.xlu0 %929
    %v932 = vmul.f32 %v914, %v930
    %s933 = scalar_lea.vmem [#allocation4], 6
    %v934 = vld [vmem:[%s933] sm:$0x3]
    %936 = vrot.lane.b32.xlu0 %v932, 32
    %v937 = vpop.permute.xlu0 %936
    %v938 = vsel %vm270, %v937, 0
    %940 = vmatprep.subr.mxu0 0.0
    %941 = vmatpush1.msra.mxu0 %v626
    %942 = vmatprep.subr.mxu0 0.0
    %943 = vmatpush1.msra.mxu0 %v627
    %944 = vmatprep.subr.mxu0 0.0
    %945 = vmatpush1.msra.mxu0 %v628
    %946 = vmatprep.subr.mxu0 0.0
    %947 = vmatpush1.msra.mxu0 %v629
    %948 = vmatprep.subr.mxu0 0.0
    %949 = vmatpush1.msra.mxu0 0.0
    %950 = vmatprep.subr.mxu0 0.0
    %951 = vmatpush1.msra.mxu0 0.0
    %952 = vmatprep.subr.mxu0 0.0
    %953 = vmatpush1.msra.mxu0 0.0
    %954 = vmatprep.subr.mxu0 0.0
    %955 = vmatpush1.msra.mxu0 0.0
    %956 = vmatprep.subr.mxu0 0.0
    %957 = vmatpush1.msra.mxu0 0.0
    %958 = vmatprep.subr.mxu0 0.0
    %959 = vmatpush1.msra.mxu0 0.0
    %960 = vmatprep.subr.mxu0 0.0
    %961 = vmatpush1.msra.mxu0 0.0
    %962 = vmatprep.subr.mxu0 0.0
    %963 = vmatpush1.msra.mxu0 0.0
    %964 = vmatprep.subr.mxu0 0.0
    %965 = vmatpush1.msra.mxu0 0.0
    %966 = vmatprep.subr.mxu0 0.0
    %967 = vmatpush1.msra.mxu0 0.0
    %968 = vmatprep.subr.mxu0 0.0
    %969 = vmatpush1.msra.mxu0 0.0
    %970 = vmatprep.subr.mxu0 0.0
    %971 = vmatpush1.msra.mxu0 0.0
    %972 = vmatprep.subr.mxu0 0.0
    %973 = vmatpush1.msra.mxu0 0.0
    %974 = vmatprep.subr.mxu0 0.0
    %975 = vmatpush1.msra.mxu0 0.0
    %976 = vmatprep.subr.mxu0 0.0
    %977 = vmatpush1.msra.mxu0 0.0
    %978 = vmatprep.subr.mxu0 0.0
    %979 = vmatpush1.msra.mxu0 0.0
    %980 = vmatprep.subr.mxu0 0.0
    %981 = vmatpush1.msra.mxu0 0.0
    %982 = vmatprep.subr.mxu0 0.0
    %983 = vmatpush1.msra.mxu0 0.0
    %984 = vmatprep.subr.mxu0 0.0
    %985 = vmatpush1.msra.mxu0 0.0
    %986 = vmatprep.subr.mxu0 0.0
    %987 = vmatpush1.msra.mxu0 0.0
    %988 = vmatprep.subr.mxu0 0.0
    %989 = vmatpush1.msra.mxu0 0.0
    %990 = vmatprep.subr.mxu0 0.0
    %991 = vmatpush1.msra.mxu0 0.0
    %992 = vmatprep.subr.mxu0 0.0
    %993 = vmatpush1.msra.mxu0 0.0
    %994 = vmatprep.subr.mxu0 0.0
    %995 = vmatpush1.msra.mxu0 0.0
    %996 = vmatprep.subr.mxu0 0.0
    %997 = vmatpush1.msra.mxu0 0.0
    %998 = vmatprep.subr.mxu0 0.0
    %999 = vmatpush1.msra.mxu0 0.0
    %1000 = vmatprep.subr.mxu0 0.0
    %1001 = vmatpush1.msra.mxu0 0.0
    %1002 = vmatprep.subr.mxu0 0.0
    %1003 = vmatpush1.msra.mxu0 0.0
    %1004 = vmatprep.mubr.f32.mxu0 0.0
    %1005 = vmatmul.mubr.f32.gmra.mrb[0].mxu0 %v938
    %v1006 = vpop.f32.mrb[0].mxu0
    %v1007 = vadd.f32 0.0, %v1006
    %v1008 = vpop.f32.mrb[0].mxu0
    %1009 = vdwg.mxu0
    %v1010 = vadd.f32 %v934, %v1007
    %v1011 = vxor.u32 %v1010, 2147483648
    %v1012 = vmul.f32 %v1011, 1.442695
    %v1013 = vpow.pop %v1012
    %v1014 = vadd.f32 %v1013, 1.0
    %v1015 = vrcp.pop %v1014
    %v1016 = vmul.f32 1.0, %v1015
    %v1017 = vtanh.pop %v1010
    %v1018 = vmul.f32 %v1016, %v926
    %1020 = vrot.lane.b32.xlu0 %v1017, 64
    %v1021 = vpop.permute.xlu0 %1020
    %v1023 = vmul.f32 %v1016, %v1021
    %1025 = vrot.lane.b32.xlu0 %v1023, 32
    %v1026 = vpop.permute.xlu0 %1025
    %v1028 = vadd.f32 %v1018, %v1026
    %v1029 = vtanh.pop %v1028
    %1031 = vrot.lane.b32.xlu0 %v1029, 64
    %v1032 = vpop.permute.xlu0 %1031
    %v1034 = vmul.f32 %v1016, %v1032
    %s1035 = scalar_lea.vmem [#allocation4], 8
    %v1036 = vld [vmem:[%s1035] sm:$0x3]
    %1038 = vrot.lane.b32.xlu0 %v1034, 32
    %v1039 = vpop.permute.xlu0 %1038
    %v1040 = vsel %vm270, %v1039, 0
    %1042 = vmatprep.subr.mxu0 0.0
    %1043 = vmatpush1.msra.mxu0 %v626
    %1044 = vmatprep.subr.mxu0 0.0
    %1045 = vmatpush1.msra.mxu0 %v627
    %1046 = vmatprep.subr.mxu0 0.0
    %1047 = vmatpush1.msra.mxu0 %v628
    %1048 = vmatprep.subr.mxu0 0.0
    %1049 = vmatpush1.msra.mxu0 %v629
    %1050 = vmatprep.subr.mxu0 0.0
    %1051 = vmatpush1.msra.mxu0 0.0
    %1052 = vmatprep.subr.mxu0 0.0
    %1053 = vmatpush1.msra.mxu0 0.0
    %1054 = vmatprep.subr.mxu0 0.0
    %1055 = vmatpush1.msra.mxu0 0.0
    %1056 = vmatprep.subr.mxu0 0.0
    %1057 = vmatpush1.msra.mxu0 0.0
    %1058 = vmatprep.subr.mxu0 0.0
    %1059 = vmatpush1.msra.mxu0 0.0
    %1060 = vmatprep.subr.mxu0 0.0
    %1061 = vmatpush1.msra.mxu0 0.0
    %1062 = vmatprep.subr.mxu0 0.0
    %1063 = vmatpush1.msra.mxu0 0.0
    %1064 = vmatprep.subr.mxu0 0.0
    %1065 = vmatpush1.msra.mxu0 0.0
    %1066 = vmatprep.subr.mxu0 0.0
    %1067 = vmatpush1.msra.mxu0 0.0
    %1068 = vmatprep.subr.mxu0 0.0
    %1069 = vmatpush1.msra.mxu0 0.0
    %1070 = vmatprep.subr.mxu0 0.0
    %1071 = vmatpush1.msra.mxu0 0.0
    %1072 = vmatprep.subr.mxu0 0.0
    %1073 = vmatpush1.msra.mxu0 0.0
    %1074 = vmatprep.subr.mxu0 0.0
    %1075 = vmatpush1.msra.mxu0 0.0
    %1076 = vmatprep.subr.mxu0 0.0
    %1077 = vmatpush1.msra.mxu0 0.0
    %1078 = vmatprep.subr.mxu0 0.0
    %1079 = vmatpush1.msra.mxu0 0.0
    %1080 = vmatprep.subr.mxu0 0.0
    %1081 = vmatpush1.msra.mxu0 0.0
    %1082 = vmatprep.subr.mxu0 0.0
    %1083 = vmatpush1.msra.mxu0 0.0
    %1084 = vmatprep.subr.mxu0 0.0
    %1085 = vmatpush1.msra.mxu0 0.0
    %1086 = vmatprep.subr.mxu0 0.0
    %1087 = vmatpush1.msra.mxu0 0.0
    %1088 = vmatprep.subr.mxu0 0.0
    %1089 = vmatpush1.msra.mxu0 0.0
    %1090 = vmatprep.subr.mxu0 0.0
    %1091 = vmatpush1.msra.mxu0 0.0
    %1092 = vmatprep.subr.mxu0 0.0
    %1093 = vmatpush1.msra.mxu0 0.0
    %1094 = vmatprep.subr.mxu0 0.0
    %1095 = vmatpush1.msra.mxu0 0.0
    %1096 = vmatprep.subr.mxu0 0.0
    %1097 = vmatpush1.msra.mxu0 0.0
    %1098 = vmatprep.subr.mxu0 0.0
    %1099 = vmatpush1.msra.mxu0 0.0
    %1100 = vmatprep.subr.mxu0 0.0
    %1101 = vmatpush1.msra.mxu0 0.0
    %1102 = vmatprep.subr.mxu0 0.0
    %1103 = vmatpush1.msra.mxu0 0.0
    %1104 = vmatprep.subr.mxu0 0.0
    %1105 = vmatpush1.msra.mxu0 0.0
    %1106 = vmatprep.mubr.f32.mxu0 0.0
    %1107 = vmatmul.mubr.f32.gmra.mrb[0].mxu0 %v1040
    %v1108 = vpop.f32.mrb[0].mxu0
    %v1109 = vadd.f32 0.0, %v1108
    %v1110 = vpop.f32.mrb[0].mxu0
    %1111 = vdwg.mxu0
    %v1112 = vadd.f32 %v1036, %v1109
    %v1113 = vxor.u32 %v1112, 2147483648
    %v1114 = vmul.f32 %v1113, 1.442695
    %v1115 = vpow.pop %v1114
    %v1116 = vadd.f32 %v1115, 1.0
    %v1117 = vrcp.pop %v1116
    %v1118 = vmul.f32 1.0, %v1117
    %v1119 = vtanh.pop %v1112
    %v1120 = vmul.f32 %v1118, %v1028
    %1122 = vrot.lane.b32.xlu0 %v1119, 64
    %v1123 = vpop.permute.xlu0 %1122
    %v1125 = vmul.f32 %v1118, %v1123
    %1127 = vrot.lane.b32.xlu0 %v1125, 32
    %v1128 = vpop.permute.xlu0 %1127
    %v1130 = vadd.f32 %v1120, %v1128
    %v1131 = vtanh.pop %v1130
    %1133 = vrot.lane.b32.xlu0 %v1131, 64
    %v1134 = vpop.permute.xlu0 %1133
    %v1136 = vmul.f32 %v1118, %v1134
    %s1137 = scalar_lea.vmem [#allocation4], 10
    %v1138 = vld [vmem:[%s1137] sm:$0x3]
    %1140 = vrot.lane.b32.xlu0 %v1136, 32
    %v1141 = vpop.permute.xlu0 %1140
    %v1142 = vsel %vm270, %v1141, 0
    %1144 = vmatprep.subr.mxu0 0.0
    %1145 = vmatpush1.msra.mxu0 %v626
    %1146 = vmatprep.subr.mxu0 0.0
    %1147 = vmatpush1.msra.mxu0 %v627
    %1148 = vmatprep.subr.mxu0 0.0
    %1149 = vmatpush1.msra.mxu0 %v628
    %1150 = vmatprep.subr.mxu0 0.0
    %1151 = vmatpush1.msra.mxu0 %v629
    %1152 = vmatprep.subr.mxu0 0.0
    %1153 = vmatpush1.msra.mxu0 0.0
    %1154 = vmatprep.subr.mxu0 0.0
    %1155 = vmatpush1.msra.mxu0 0.0
    %1156 = vmatprep.subr.mxu0 0.0
    %1157 = vmatpush1.msra.mxu0 0.0
    %1158 = vmatprep.subr.mxu0 0.0
    %1159 = vmatpush1.msra.mxu0 0.0
    %1160 = vmatprep.subr.mxu0 0.0
    %1161 = vmatpush1.msra.mxu0 0.0
    %1162 = vmatprep.subr.mxu0 0.0
    %1163 = vmatpush1.msra.mxu0 0.0
    %1164 = vmatprep.subr.mxu0 0.0
    %1165 = vmatpush1.msra.mxu0 0.0
    %1166 = vmatprep.subr.mxu0 0.0
    %1167 = vmatpush1.msra.mxu0 0.0
    %1168 = vmatprep.subr.mxu0 0.0
    %1169 = vmatpush1.msra.mxu0 0.0
    %1170 = vmatprep.subr.mxu0 0.0
    %1171 = vmatpush1.msra.mxu0 0.0
    %1172 = vmatprep.subr.mxu0 0.0
    %1173 = vmatpush1.msra.mxu0 0.0
    %1174 = vmatprep.subr.mxu0 0.0
    %1175 = vmatpush1.msra.mxu0 0.0
    %1176 = vmatprep.subr.mxu0 0.0
    %1177 = vmatpush1.msra.mxu0 0.0
    %1178 = vmatprep.subr.mxu0 0.0
    %1179 = vmatpush1.msra.mxu0 0.0
    %1180 = vmatprep.subr.mxu0 0.0
    %1181 = vmatpush1.msra.mxu0 0.0
    %1182 = vmatprep.subr.mxu0 0.0
    %1183 = vmatpush1.msra.mxu0 0.0
    %1184 = vmatprep.subr.mxu0 0.0
    %1185 = vmatpush1.msra.mxu0 0.0
    %1186 = vmatprep.subr.mxu0 0.0
    %1187 = vmatpush1.msra.mxu0 0.0
    %1188 = vmatprep.subr.mxu0 0.0
    %1189 = vmatpush1.msra.mxu0 0.0
    %1190 = vmatprep.subr.mxu0 0.0
    %1191 = vmatpush1.msra.mxu0 0.0
    %1192 = vmatprep.subr.mxu0 0.0
    %1193 = vmatpush1.msra.mxu0 0.0
    %1194 = vmatprep.subr.mxu0 0.0
    %1195 = vmatpush1.msra.mxu0 0.0
    %1196 = vmatprep.subr.mxu0 0.0
    %1197 = vmatpush1.msra.mxu0 0.0
    %1198 = vmatprep.subr.mxu0 0.0
    %1199 = vmatpush1.msra.mxu0 0.0
    %1200 = vmatprep.subr.mxu0 0.0
    %1201 = vmatpush1.msra.mxu0 0.0
    %1202 = vmatprep.subr.mxu0 0.0
    %1203 = vmatpush1.msra.mxu0 0.0
    %1204 = vmatprep.subr.mxu0 0.0
    %1205 = vmatpush1.msra.mxu0 0.0
    %1206 = vmatprep.subr.mxu0 0.0
    %1207 = vmatpush1.msra.mxu0 0.0
    %1208 = vmatprep.mubr.f32.mxu0 0.0
    %1209 = vmatmul.mubr.f32.gmra.mrb[0].mxu0 %v1142
    %v1210 = vpop.f32.mrb[0].mxu0
    %v1211 = vadd.f32 0.0, %v1210
    %v1212 = vpop.f32.mrb[0].mxu0
    %1213 = vdwg.mxu0
    %v1214 = vadd.f32 %v1138, %v1211
    %v1215 = vxor.u32 %v1214, 2147483648
    %v1216 = vmul.f32 %v1215, 1.442695
    %v1217 = vpow.pop %v1216
    %v1218 = vadd.f32 %v1217, 1.0
    %v1219 = vrcp.pop %v1218
    %v1220 = vmul.f32 1.0, %v1219
    %v1221 = vtanh.pop %v1214
    %v1222 = vmul.f32 %v1220, %v1130
    %1224 = vrot.lane.b32.xlu0 %v1221, 64
    %v1225 = vpop.permute.xlu0 %1224
    %v1227 = vmul.f32 %v1220, %v1225
    %1229 = vrot.lane.b32.xlu0 %v1227, 32
    %v1230 = vpop.permute.xlu0 %1229
    %v1232 = vadd.f32 %v1222, %v1230
    %v1233 = vtanh.pop %v1232
    %1235 = vrot.lane.b32.xlu0 %v1233, 64
    %v1236 = vpop.permute.xlu0 %1235
    %v1238 = vmul.f32 %v1220, %v1236
    %s1239 = scalar_lea.vmem [#allocation4], 12
    %v1240 = vld [vmem:[%s1239] sm:$0x3]
    %1242 = vrot.lane.b32.xlu0 %v1238, 32
    %v1243 = vpop.permute.xlu0 %1242
    %v1244 = vsel %vm270, %v1243, 0
    %1246 = vmatprep.subr.mxu0 0.0
    %1247 = vmatpush1.msra.mxu0 %v626
    %1248 = vmatprep.subr.mxu0 0.0
    %1249 = vmatpush1.msra.mxu0 %v627
    %1250 = vmatprep.subr.mxu0 0.0
    %1251 = vmatpush1.msra.mxu0 %v628
    %1252 = vmatprep.subr.mxu0 0.0
    %1253 = vmatpush1.msra.mxu0 %v629
    %1254 = vmatprep.subr.mxu0 0.0
    %1255 = vmatpush1.msra.mxu0 0.0
    %1256 = vmatprep.subr.mxu0 0.0
    %1257 = vmatpush1.msra.mxu0 0.0
    %1258 = vmatprep.subr.mxu0 0.0
    %1259 = vmatpush1.msra.mxu0 0.0
    %1260 = vmatprep.subr.mxu0 0.0
    %1261 = vmatpush1.msra.mxu0 0.0
    %1262 = vmatprep.subr.mxu0 0.0
    %1263 = vmatpush1.msra.mxu0 0.0
    %1264 = vmatprep.subr.mxu0 0.0
    %1265 = vmatpush1.msra.mxu0 0.0
    %1266 = vmatprep.subr.mxu0 0.0
    %1267 = vmatpush1.msra.mxu0 0.0
    %1268 = vmatprep.subr.mxu0 0.0
    %1269 = vmatpush1.msra.mxu0 0.0
    %1270 = vmatprep.subr.mxu0 0.0
    %1271 = vmatpush1.msra.mxu0 0.0
    %1272 = vmatprep.subr.mxu0 0.0
    %1273 = vmatpush1.msra.mxu0 0.0
    %1274 = vmatprep.subr.mxu0 0.0
    %1275 = vmatpush1.msra.mxu0 0.0
    %1276 = vmatprep.subr.mxu0 0.0
    %1277 = vmatpush1.msra.mxu0 0.0
    %1278 = vmatprep.subr.mxu0 0.0
    %1279 = vmatpush1.msra.mxu0 0.0
    %1280 = vmatprep.subr.mxu0 0.0
    %1281 = vmatpush1.msra.mxu0 0.0
    %1282 = vmatprep.subr.mxu0 0.0
    %1283 = vmatpush1.msra.mxu0 0.0
    %1284 = vmatprep.subr.mxu0 0.0
    %1285 = vmatpush1.msra.mxu0 0.0
    %1286 = vmatprep.subr.mxu0 0.0
    %1287 = vmatpush1.msra.mxu0 0.0
    %1288 = vmatprep.subr.mxu0 0.0
    %1289 = vmatpush1.msra.mxu0 0.0
    %1290 = vmatprep.subr.mxu0 0.0
    %1291 = vmatpush1.msra.mxu0 0.0
    %1292 = vmatprep.subr.mxu0 0.0
    %1293 = vmatpush1.msra.mxu0 0.0
    %1294 = vmatprep.subr.mxu0 0.0
    %1295 = vmatpush1.msra.mxu0 0.0
    %1296 = vmatprep.subr.mxu0 0.0
    %1297 = vmatpush1.msra.mxu0 0.0
    %1298 = vmatprep.subr.mxu0 0.0
    %1299 = vmatpush1.msra.mxu0 0.0
    %1300 = vmatprep.subr.mxu0 0.0
    %1301 = vmatpush1.msra.mxu0 0.0
    %1302 = vmatprep.subr.mxu0 0.0
    %1303 = vmatpush1.msra.mxu0 0.0
    %1304 = vmatprep.subr.mxu0 0.0
    %1305 = vmatpush1.msra.mxu0 0.0
    %1306 = vmatprep.subr.mxu0 0.0
    %1307 = vmatpush1.msra.mxu0 0.0
    %1308 = vmatprep.subr.mxu0 0.0
    %1309 = vmatpush1.msra.mxu0 0.0
    %1310 = vmatprep.mubr.f32.mxu0 0.0
    %1311 = vmatmul.mubr.f32.gmra.mrb[0].mxu0 %v1244
    %v1312 = vpop.f32.mrb[0].mxu0
    %v1313 = vadd.f32 0.0, %v1312
    %v1314 = vpop.f32.mrb[0].mxu0
    %1315 = vdwg.mxu0
    %v1316 = vadd.f32 %v1240, %v1313
    %v1317 = vxor.u32 %v1316, 2147483648
    %v1318 = vmul.f32 %v1317, 1.442695
    %v1319 = vpow.pop %v1318
    %v1320 = vadd.f32 %v1319, 1.0
    %v1321 = vrcp.pop %v1320
    %v1322 = vmul.f32 1.0, %v1321
    %v1323 = vtanh.pop %v1316
    %v1324 = vmul.f32 %v1322, %v1232
    %1326 = vrot.lane.b32.xlu0 %v1323, 64
    %v1327 = vpop.permute.xlu0 %1326
    %v1329 = vmul.f32 %v1322, %v1327
    %1331 = vrot.lane.b32.xlu0 %v1329, 32
    %v1332 = vpop.permute.xlu0 %1331
    %v1334 = vadd.f32 %v1324, %v1332
    %v1335 = vtanh.pop %v1334
    %1337 = vrot.lane.b32.xlu0 %v1335, 64
    %v1338 = vpop.permute.xlu0 %1337
    %v1340 = vmul.f32 %v1322, %v1338
    %s1341 = scalar_lea.vmem [#allocation4], 14
    %v1342 = vld [vmem:[%s1341] sm:$0x3]
    %1344 = vrot.lane.b32.xlu0 %v1340, 32
    %v1345 = vpop.permute.xlu0 %1344
    %v1346 = vsel %vm270, %v1345, 0
    %1348 = vmatprep.subr.mxu0 0.0
    %1349 = vmatpush1.msra.mxu0 %v626
    %1350 = vmatprep.subr.mxu0 0.0
    %1351 = vmatpush1.msra.mxu0 %v627
    %1352 = vmatprep.subr.mxu0 0.0
    %1353 = vmatpush1.msra.mxu0 %v628
    %1354 = vmatprep.subr.mxu0 0.0
    %1355 = vmatpush1.msra.mxu0 %v629
    %1356 = vmatprep.subr.mxu0 0.0
    %1357 = vmatpush1.msra.mxu0 0.0
    %1358 = vmatprep.subr.mxu0 0.0
    %1359 = vmatpush1.msra.mxu0 0.0
    %1360 = vmatprep.subr.mxu0 0.0
    %1361 = vmatpush1.msra.mxu0 0.0
    %1362 = vmatprep.subr.mxu0 0.0
    %1363 = vmatpush1.msra.mxu0 0.0
    %1364 = vmatprep.subr.mxu0 0.0
    %1365 = vmatpush1.msra.mxu0 0.0
    %1366 = vmatprep.subr.mxu0 0.0
    %1367 = vmatpush1.msra.mxu0 0.0
    %1368 = vmatprep.subr.mxu0 0.0
    %1369 = vmatpush1.msra.mxu0 0.0
    %1370 = vmatprep.subr.mxu0 0.0
    %1371 = vmatpush1.msra.mxu0 0.0
    %1372 = vmatprep.subr.mxu0 0.0
    %1373 = vmatpush1.msra.mxu0 0.0
    %1374 = vmatprep.subr.mxu0 0.0
    %1375 = vmatpush1.msra.mxu0 0.0
    %1376 = vmatprep.subr.mxu0 0.0
    %1377 = vmatpush1.msra.mxu0 0.0
    %1378 = vmatprep.subr.mxu0 0.0
    %1379 = vmatpush1.msra.mxu0 0.0
    %1380 = vmatprep.subr.mxu0 0.0
    %1381 = vmatpush1.msra.mxu0 0.0
    %1382 = vmatprep.subr.mxu0 0.0
    %1383 = vmatpush1.msra.mxu0 0.0
    %1384 = vmatprep.subr.mxu0 0.0
    %1385 = vmatpush1.msra.mxu0 0.0
    %1386 = vmatprep.subr.mxu0 0.0
    %1387 = vmatpush1.msra.mxu0 0.0
    %1388 = vmatprep.subr.mxu0 0.0
    %1389 = vmatpush1.msra.mxu0 0.0
    %1390 = vmatprep.subr.mxu0 0.0
    %1391 = vmatpush1.msra.mxu0 0.0
    %1392 = vmatprep.subr.mxu0 0.0
    %1393 = vmatpush1.msra.mxu0 0.0
    %1394 = vmatprep.subr.mxu0 0.0
    %1395 = vmatpush1.msra.mxu0 0.0
    %1396 = vmatprep.subr.mxu0 0.0
    %1397 = vmatpush1.msra.mxu0 0.0
    %1398 = vmatprep.subr.mxu0 0.0
    %1399 = vmatpush1.msra.mxu0 0.0
    %1400 = vmatprep.subr.mxu0 0.0
    %1401 = vmatpush1.msra.mxu0 0.0
    %1402 = vmatprep.subr.mxu0 0.0
    %1403 = vmatpush1.msra.mxu0 0.0
    %1404 = vmatprep.subr.mxu0 0.0
    %1405 = vmatpush1.msra.mxu0 0.0
    %1406 = vmatprep.subr.mxu0 0.0
    %1407 = vmatpush1.msra.mxu0 0.0
    %1408 = vmatprep.subr.mxu0 0.0
    %1409 = vmatpush1.msra.mxu0 0.0
    %1410 = vmatprep.subr.mxu0 0.0
    %1411 = vmatpush1.msra.mxu0 0.0
    %1412 = vmatprep.mubr.f32.mxu0 0.0
    %1413 = vmatmul.mubr.f32.gmra.mrb[0].mxu0 %v1346
    %v1414 = vpop.f32.mrb[0].mxu0
    %v1415 = vadd.f32 0.0, %v1414
    %v1416 = vpop.f32.mrb[0].mxu0
    %1417 = vdwg.mxu0
    %v1418 = vadd.f32 %v1342, %v1415
    %v1419 = vxor.u32 %v1418, 2147483648
    %v1420 = vmul.f32 %v1419, 1.442695
    %v1421 = vpow.pop %v1420
    %v1422 = vadd.f32 %v1421, 1.0
    %v1423 = vrcp.pop %v1422
    %v1424 = vmul.f32 1.0, %v1423
    %v1425 = vtanh.pop %v1418
    %v1426 = vmul.f32 %v1424, %v1334
    %1428 = vrot.lane.b32.xlu0 %v1425, 64
    %v1429 = vpop.permute.xlu0 %1428
    %v1431 = vmul.f32 %v1424, %v1429
    %1433 = vrot.lane.b32.xlu0 %v1431, 32
    %v1434 = vpop.permute.xlu0 %1433
    %v1436 = vadd.f32 %v1426, %v1434
    %v1437 = vtanh.pop %v1436
    %1439 = vrot.lane.b32.xlu0 %v1437, 64
    %v1440 = vpop.permute.xlu0 %1439
    %v1442 = vmul.f32 %v1424, %v1440
    %1444 = vrot.lane.b32.xlu0 %v1442, 32
    %v1445 = vpop.permute.xlu0 %1444
    %v1447 = vsel %vm268, %v1445, 0.0
    %1448 = vadd.xlane.f32.xlu0 %v1447
    %v1449 = vpop.xlane.xlu0 %1448
    %v1450 = vmul.f32 %v1449, %v465
    %v1451 = vsub.f32 %v1442, %v1450
    %v1452 = vmul.f32 %v1451, %v1451
    %1454 = vrot.lane.b32.xlu0 %v1452, 32
    %v1455 = vpop.permute.xlu0 %1454
    %v1457 = vsel %vm268, %v1455, 0.0
    %1458 = vadd.xlane.f32.xlu0 %v1457
    %v1459 = vpop.xlane.xlu0 %1458
    %v1460 = vmul.f32 %v1459, %v465
    %v1461 = vadd.f32 %v1460, 1e-05
    %v1462 = vrsqrt.pop %v1461
    %v1463 = vmul.f32 %v1451, %v1462
    %v1464 = vld [vmem:[%s12] sm:$0x1]
    %v1466 = vlaneseq
    %v1467 = vshrl.u32 %v1466, 7
    %v1468 = vsub.s32 0, %v1467
    %v1469 = vrot.slane %v1464, %v1468
    %1470 = vrot.lane.b32.xlu0 %v1469, 96
    %v1471 = vpop.permute.xlu0 %1470
    %v1473 = vmul.f32 %v1463, %v1471
    %v1474 = vld [vmem:[%s13] sm:$0x1]
    %v1476 = vlaneseq
    %v1477 = vshrl.u32 %v1476, 7
    %v1478 = vsub.s32 0, %v1477
    %v1479 = vrot.slane %v1474, %v1478
    %1480 = vrot.lane.b32.xlu0 %v1479, 96
    %v1481 = vpop.permute.xlu0 %1480
    %v1483 = vadd.f32 %v1473, %v1481
    %v1484 = vld [vmem:[%s14] sm:$0xff]
    %v1485 = vld [vmem:[%s14 + $0x8] sm:$0xff]
    %v1486 = vld [vmem:[%s14 + $0x10] sm:$0xff]
    %v1487 = vld [vmem:[%s14 + $0x18] sm:$0xff]
    %v1488 = vld [vmem:[%s15] sm:$0x1]
    %v1490 = vlaneseq
    %v1491 = vshrl.u32 %v1490, 7
    %v1492 = vsub.s32 0, %v1491
    %v1493 = vrot.slane %v1488, %v1492
    %1496 = vrot.lane.b32.xlu0 %v1483, 32
    %v1497 = vpop.permute.xlu0 %1496
    %v1498 = vsel %vm270, %v1497, 0
    %1500 = vmatprep.subr.mxu0 0.0
    %1501 = vmatpush1.msra.mxu0 %v1484
    %1502 = vmatprep.subr.mxu0 0.0
    %1503 = vmatpush1.msra.mxu0 %v1485
    %1504 = vmatprep.subr.mxu0 0.0
    %1505 = vmatpush1.msra.mxu0 %v1486
    %1506 = vmatprep.subr.mxu0 0.0
    %1507 = vmatpush1.msra.mxu0 %v1487
    %1508 = vmatprep.subr.mxu0 0.0
    %1509 = vmatpush1.msra.mxu0 0.0
    %1510 = vmatprep.subr.mxu0 0.0
    %1511 = vmatpush1.msra.mxu0 0.0
    %1512 = vmatprep.subr.mxu0 0.0
    %1513 = vmatpush1.msra.mxu0 0.0
    %1514 = vmatprep.subr.mxu0 0.0
    %1515 = vmatpush1.msra.mxu0 0.0
    %1516 = vmatprep.subr.mxu0 0.0
    %1517 = vmatpush1.msra.mxu0 0.0
    %1518 = vmatprep.subr.mxu0 0.0
    %1519 = vmatpush1.msra.mxu0 0.0
    %1520 = vmatprep.subr.mxu0 0.0
    %1521 = vmatpush1.msra.mxu0 0.0
    %1522 = vmatprep.subr.mxu0 0.0
    %1523 = vmatpush1.msra.mxu0 0.0
    %1524 = vmatprep.subr.mxu0 0.0
    %1525 = vmatpush1.msra.mxu0 0.0
    %1526 = vmatprep.subr.mxu0 0.0
    %1527 = vmatpush1.msra.mxu0 0.0
    %1528 = vmatprep.subr.mxu0 0.0
    %1529 = vmatpush1.msra.mxu0 0.0
    %1530 = vmatprep.subr.mxu0 0.0
    %1531 = vmatpush1.msra.mxu0 0.0
    %1532 = vmatprep.subr.mxu0 0.0
    %1533 = vmatpush1.msra.mxu0 0.0
    %1534 = vmatprep.subr.mxu0 0.0
    %1535 = vmatpush1.msra.mxu0 0.0
    %1536 = vmatprep.subr.mxu0 0.0
    %1537 = vmatpush1.msra.mxu0 0.0
    %1538 = vmatprep.subr.mxu0 0.0
    %1539 = vmatpush1.msra.mxu0 0.0
    %1540 = vmatprep.subr.mxu0 0.0
    %1541 = vmatpush1.msra.mxu0 0.0
    %1542 = vmatprep.subr.mxu0 0.0
    %1543 = vmatpush1.msra.mxu0 0.0
    %1544 = vmatprep.subr.mxu0 0.0
    %1545 = vmatpush1.msra.mxu0 0.0
    %1546 = vmatprep.subr.mxu0 0.0
    %1547 = vmatpush1.msra.mxu0 0.0
    %1548 = vmatprep.subr.mxu0 0.0
    %1549 = vmatpush1.msra.mxu0 0.0
    %1550 = vmatprep.subr.mxu0 0.0
    %1551 = vmatpush1.msra.mxu0 0.0
    %1552 = vmatprep.subr.mxu0 0.0
    %1553 = vmatpush1.msra.mxu0 0.0
    %1554 = vmatprep.subr.mxu0 0.0
    %1555 = vmatpush1.msra.mxu0 0.0
    %1556 = vmatprep.subr.mxu0 0.0
    %1557 = vmatpush1.msra.mxu0 0.0
    %1558 = vmatprep.subr.mxu0 0.0
    %1559 = vmatpush1.msra.mxu0 0.0
    %1560 = vmatprep.subr.mxu0 0.0
    %1561 = vmatpush1.msra.mxu0 0.0
    %1562 = vmatprep.subr.mxu0 0.0
    %1563 = vmatpush1.msra.mxu0 0.0
    %1564 = vmatprep.mubr.f32.mxu0 0.0
    %1565 = vmatmul.mubr.f32.gmra.mrb[0].mxu0 %v1498
    %v1566 = vpop.f32.mrb[0].mxu0
    %v1567 = vadd.f32 %v1493, %v1566
    %v1568 = vpop.f32.mrb[0].mxu0
    %1569 = vdwg.mxu0
    %v1570 = vmax.f32 %v1567, 0.0
    %1571 = vst.msk [vmem:[#allocation8] sm:$0x3] %vm268, %v1570
    // Predicated region
    $region70: #{tpu_custom_call.1} parent=1 // pred_check
      _
    $region71: #{tpu_custom_call.1} parent=1 // pred_check_branch
      %1573 = sbr.rel (0) target = $region73
    $region72: #{tpu_custom_call.1} parent=1 // pred_region
      %s1575 = ssub.s32 32, 32
      %1576 = vsyncadd [#allocation7], %s1575
      %s1578 = sshll.u32 [#allocation8], 4
      %s1579 = int_to_ptr.vmem [resolvable:$true] %s1578
      %1581 = dma.vmem_to_hbm [thread:$0]  %s1579, 32, %s16, [#allocation7]
    $region73: #{tpu_custom_call.1} parent=1 // pred_fallthru
      _
    // Predicated region
    $region74: #{tpu_custom_call.1} parent=1 // pred_check
      _
    $region75: #{tpu_custom_call.1} parent=1 // pred_check_branch
      %1583 = sbr.rel (0) target = $region77
    $region76: #{tpu_custom_call.1} parent=1 // pred_region
      %1584 = dma.done [#allocation7], 32
    $region77: #{tpu_custom_call.1} parent=1 // pred_fallthru
      _
    %1585 = vsyncpa [#allocation6], 1
    %1586 = vsyncpa [#allocation7], 1

</llo_original>
